<compile_context>
chip_gen: v7x
topology: tpu7x:2x2x1
jax: 0.10.0
libtpu: 0.0.40
codegen_flags: <defaults>
</compile_context>

<pallas_src>
import functools

import jax
import jax.numpy as jnp
from jax.experimental import pallas as pl
from jax.experimental.pallas import tpu as pltpu


def _sigmoid(x):
    return 1.0 / (1.0 + jnp.exp(-x))


def _softplus(x):
    # numerically stable softplus
    return jnp.maximum(x, 0.0) + jnp.log(1.0 + jnp.exp(-jnp.abs(x)))


def _cgconv_kernel(src_ref, dstc_ref, dstr_ref, ea_ref, d_ref, x_ref,
                   wf_ref, bf_ref, ws_ref, bs_ref, out_ref, *, if_exp):
    n_pad, fdim = x_ref.shape
    te, ddim = ea_ref.shape

    # Step 0: seed the resident accumulator with the residual (out += x at the end).
    @pl.when(pl.program_id(0) == 0)
    def _():
        out_ref[...] = x_ref[...]

    x = x_ref[...]                                              # (N_pad, F)

    # One-hot gathers on the MXU: (TE, N_pad) @ (N_pad, F) -> (TE, F)
    lane_ids = jax.lax.broadcasted_iota(jnp.int32, (te, n_pad), 1)
    oh_i = (lane_ids == dstc_ref[...]).astype(jnp.float32)      # x_i = x[dst]
    oh_j = (lane_ids == src_ref[...]).astype(jnp.float32)       # x_j = x[src]
    x_i = jnp.dot(oh_i, x, preferred_element_type=jnp.float32)
    x_j = jnp.dot(oh_j, x, preferred_element_type=jnp.float32)

    ea = ea_ref[...]                                            # (TE, D)

    # Split-weight matmuls replace cat([x_i, x_j, e], -1) @ W (no lane concat).
    zf = (jnp.dot(x_i, wf_ref[0:fdim, :], preferred_element_type=jnp.float32)
          + jnp.dot(x_j, wf_ref[fdim:2 * fdim, :], preferred_element_type=jnp.float32)
          + jnp.dot(ea, wf_ref[2 * fdim:2 * fdim + ddim, :],
                    preferred_element_type=jnp.float32)
          + bf_ref[...])
    zs = (jnp.dot(x_i, ws_ref[0:fdim, :], preferred_element_type=jnp.float32)
          + jnp.dot(x_j, ws_ref[fdim:2 * fdim, :], preferred_element_type=jnp.float32)
          + jnp.dot(ea, ws_ref[2 * fdim:2 * fdim + ddim, :],
                    preferred_element_type=jnp.float32)
          + bs_ref[...])

    msg = _sigmoid(zf) * _softplus(zs)                          # (TE, F)

    if if_exp:                                                  # sigma=3, n=2 baked in
        d = d_ref[...]                                          # (TE, 1)
        msg = msg * jnp.exp((d * d) * (-1.0 / 18.0))

    # Scatter-add on the MXU: (N_pad, TE) @ (TE, F), accumulated in the output block.
    sub_ids = jax.lax.broadcasted_iota(jnp.int32, (n_pad, te), 0)
    oh_s = (sub_ids == dstr_ref[...]).astype(jnp.float32)
    out_ref[...] += jnp.dot(oh_s, msg, preferred_element_type=jnp.float32)


def _edge_mlp_kernel(src_ref, dstc_ref, ef_ref, x_ref,
                     w1_ref, b1_ref, w2_ref, b2_ref, out_ref):
    n_pad, fdim = x_ref.shape
    te, ddim = ef_ref.shape
    x = x_ref[...]

    # One-hot gathers of the *updated* atom features.
    lane_ids = jax.lax.broadcasted_iota(jnp.int32, (te, n_pad), 1)
    oh_r = (lane_ids == src_ref[...]).astype(jnp.float32)       # atom_out[row], row = src
    oh_c = (lane_ids == dstc_ref[...]).astype(jnp.float32)      # atom_out[col], col = dst
    xr = jnp.dot(oh_r, x, preferred_element_type=jnp.float32)
    xc = jnp.dot(oh_c, x, preferred_element_type=jnp.float32)

    ef = ef_ref[...]
    h = (jnp.dot(xr, w1_ref[0:fdim, :], preferred_element_type=jnp.float32)
         + jnp.dot(xc, w1_ref[fdim:2 * fdim, :], preferred_element_type=jnp.float32)
         + jnp.dot(ef, w1_ref[2 * fdim:2 * fdim + ddim, :],
                   preferred_element_type=jnp.float32)
         + b1_ref[...])
    h = h * _sigmoid(h)                                         # SiLU
    o = jnp.dot(h, w2_ref[...], preferred_element_type=jnp.float32) + b2_ref[...]
    out_ref[...] = o * _sigmoid(o)                              # SiLU


def _round_up(x, m):
    return (x + m - 1) // m * m


def mp_layer_forward(atom_fea, edge_index, edge_fea, distance, params,
                     *, if_exp=True, block_e=128):
    """Returns (atom_out (N,F), edge_out (E, out_edge_fea_len))."""
    N, F = atom_fea.shape
    E, D = edge_fea.shape
    H = params['w1'].shape[1]
    Dout = params['w2'].shape[1]

    n_pad = _round_up(N, 8)
    e_pad = _round_up(E, block_e)
    pad_e = e_pad - E

    src = edge_index[0].astype(jnp.int32)
    dst = edge_index[1].astype(jnp.int32)
    # Pad edges: index -1 never matches a node id -> zero gather / no scatter.
    src_p = jnp.pad(src, (0, pad_e), constant_values=-1)
    dst_p = jnp.pad(dst, (0, pad_e), constant_values=-1)
    ea_p = jnp.pad(edge_fea.astype(jnp.float32), ((0, pad_e), (0, 0)))
    d_p = jnp.pad(distance.astype(jnp.float32), (0, pad_e)).reshape(e_pad, 1)
    x_p = jnp.pad(atom_fea.astype(jnp.float32), ((0, n_pad - N), (0, 0)))

    src_col = src_p.reshape(e_pad, 1)
    dst_col = dst_p.reshape(e_pad, 1)
    dst_row = dst_p.reshape(1, e_pad)

    wf = params['wf'].astype(jnp.float32)
    bf = params['bf'].reshape(1, F).astype(jnp.float32)
    ws = params['ws'].astype(jnp.float32)
    bs = params['bs'].reshape(1, F).astype(jnp.float32)
    w1 = params['w1'].astype(jnp.float32)
    b1 = params['b1'].reshape(1, H).astype(jnp.float32)
    w2 = params['w2'].astype(jnp.float32)
    b2 = params['b2'].reshape(1, Dout).astype(jnp.float32)

    n_eblk = e_pad // block_e

    def full(*shape):
        return pl.BlockSpec(shape, lambda i: (0,) * len(shape))

    # --- fused CGConv: gather -> message MLP -> scatter-add -> residual ---
    atom_out_p = pl.pallas_call(
        functools.partial(_cgconv_kernel, if_exp=if_exp),
        out_shape=jax.ShapeDtypeStruct((n_pad, F), jnp.float32),
        grid=(n_eblk,),
        in_specs=[
            pl.BlockSpec((block_e, 1), lambda i: (i, 0)),      # src (column layout)
            pl.BlockSpec((block_e, 1), lambda i: (i, 0)),      # dst (column layout)
            pl.BlockSpec((1, block_e), lambda i: (0, i)),      # dst (row layout, scatter)
            pl.BlockSpec((block_e, D), lambda i: (i, 0)),      # edge_attr
            pl.BlockSpec((block_e, 1), lambda i: (i, 0)),      # distance
            full(n_pad, F),                                    # atom features
            full(2 * F + D, F), full(1, F),                    # lin_f
            full(2 * F + D, F), full(1, F),                    # lin_s
        ],
        out_specs=full(n_pad, F),                              # resident accumulator
        compiler_params=pltpu.CompilerParams(
            dimension_semantics=("arbitrary",)),
    )(src_col, dst_col, dst_row, ea_p, d_p, x_p, wf, bf, ws, bs)

    # --- edge-update MLP: silu(fc2(silu(fc1(cat([a[src], a[dst], e]))))) ---
    edge_out_p = pl.pallas_call(
        _edge_mlp_kernel,
        out_shape=jax.ShapeDtypeStruct((e_pad, Dout), jnp.float32),
        grid=(n_eblk,),
        in_specs=[
            pl.BlockSpec((block_e, 1), lambda i: (i, 0)),      # src
            pl.BlockSpec((block_e, 1), lambda i: (i, 0)),      # dst
            pl.BlockSpec((block_e, D), lambda i: (i, 0)),      # edge_fea
            full(n_pad, F),                                    # updated atom features
            full(2 * F + D, H), full(1, H),                    # fc1
            full(H, Dout), full(1, Dout),                      # fc2
        ],
        out_specs=pl.BlockSpec((block_e, Dout), lambda i: (i, 0)),
        compiler_params=pltpu.CompilerParams(
            dimension_semantics=("parallel",)),
    )(src_col, dst_col, ea_p, atom_out_p, w1, b1, w2, b2)

    return atom_out_p[:N], edge_out_p[:E]


def mp_layer_ref(atom_fea, edge_index, edge_fea, distance, params, *, if_exp=True):
    """Pure-JAX reference with identical semantics."""
    src, dst = edge_index[0], edge_index[1]
    x = atom_fea.astype(jnp.float32)
    z = jnp.concatenate([x[dst], x[src], edge_fea], axis=-1)     # [x_i, x_j, e]
    msg = jax.nn.sigmoid(z @ params['wf'] + params['bf']) * \
          jax.nn.softplus(z @ params['ws'] + params['bs'])
    if if_exp:
        msg = msg * jnp.exp(-distance ** 2 / 3.0 ** 2 / 2.0)[:, None]
    agg = jax.ops.segment_sum(msg, dst, num_segments=x.shape[0])
    atom_out = agg + x
    z2 = jnp.concatenate([atom_out[src], atom_out[dst], edge_fea], axis=-1)
    h = jax.nn.silu(z2 @ params['w1'] + params['b1'])
    edge_out = jax.nn.silu(h @ params['w2'] + params['b2'])
    return atom_out, edge_out


if __name__ == "__main__":
    key = jax.random.PRNGKey(0)
    N, F = 32, 64            # atoms, in_atom_fea_len
    E, D = 256, 32           # edges, in_edge_fea_len
    H, Dout = 14, 32         # fc1 hidden (per module spec), out_edge_fea_len
    din = 2 * F + D

    ks = jax.random.split(key, 12)
    atom_fea = jax.random.normal(ks[0], (N, F), jnp.float32)
    edge_fea = jax.random.normal(ks[1], (E, D), jnp.float32)
    distance = jax.random.uniform(ks[2], (E,), jnp.float32, 0.5, 5.0)
    edge_index = jax.random.randint(ks[3], (2, E), 0, N, dtype=jnp.int32)

    params = {
        'wf': jax.random.normal(ks[4], (din, F), jnp.float32) / jnp.sqrt(din),
        'bf': jax.random.normal(ks[5], (F,), jnp.float32) * 0.1,
        'ws': jax.random.normal(ks[6], (din, F), jnp.float32) / jnp.sqrt(din),
        'bs': jax.random.normal(ks[7], (F,), jnp.float32) * 0.1,
        'w1': jax.random.normal(ks[8], (din, H), jnp.float32) / jnp.sqrt(din),
        'b1': jax.random.normal(ks[9], (H,), jnp.float32) * 0.1,
        'w2': jax.random.normal(ks[10], (H, Dout), jnp.float32) / jnp.sqrt(H),
        'b2': jax.random.normal(ks[11], (Dout,), jnp.float32) * 0.1,
    }

    atom_out, edge_out = mp_layer_forward(atom_fea, edge_index, edge_fea,
                                          distance, params, if_exp=True)
    atom_out = jax.block_until_ready(atom_out)
    edge_out = jax.block_until_ready(edge_out)

    atom_ref, edge_ref = mp_layer_ref(atom_fea, edge_index, edge_fea,
                                      distance, params, if_exp=True)
    assert atom_out.shape == (N, F) and edge_out.shape == (E, Dout)
    assert jnp.allclose(atom_out, atom_ref, atol=1e-4, rtol=1e-4), "atom_fea mismatch"
    assert jnp.allclose(edge_out, edge_ref, atol=1e-4, rtol=1e-4), "edge_fea mismatch"

    print("KERNEL_OK")
</pallas_src>

<mosaic_0001>
module attributes {stable_mosaic.version = 11 : i64} {
  func.func @_cgconv_kernel(%arg0: i32, %arg1: memref<128x1xi32, #tpu.memory_space<vmem>>, %arg2: memref<128x1xi32, #tpu.memory_space<vmem>>, %arg3: memref<1x128xi32, #tpu.memory_space<vmem>>, %arg4: memref<128x32xf32, #tpu.memory_space<vmem>>, %arg5: memref<128x1xf32, #tpu.memory_space<vmem>>, %arg6: memref<32x64xf32, #tpu.memory_space<vmem>>, %arg7: memref<160x64xf32, #tpu.memory_space<vmem>>, %arg8: memref<1x64xf32, #tpu.memory_space<vmem>>, %arg9: memref<160x64xf32, #tpu.memory_space<vmem>>, %arg10: memref<1x64xf32, #tpu.memory_space<vmem>>, %arg11: memref<32x64xf32, #tpu.memory_space<vmem>>) attributes {dimension_semantics = [#tpu.dimension_semantics<arbitrary>], iteration_bounds = array<i64: 2>, scalar_prefetch = 0 : i64, scratch_operands = 0 : i64, tpu.core_type = #tpu.core_type<tc>, window_params = [{transform_indices = @transform_0, window_bounds = array<i64: 128, 1>}, {transform_indices = @transform_1, window_bounds = array<i64: 128, 1>}, {transform_indices = @transform_2, window_bounds = array<i64: 1, 128>}, {transform_indices = @transform_3, window_bounds = array<i64: 128, 32>}, {transform_indices = @transform_4, window_bounds = array<i64: 128, 1>}, {pipeline_mode = #tpu.pipeline_mode<synchronous>, transform_indices = @transform_5, window_bounds = array<i64: 32, 64>}, {pipeline_mode = #tpu.pipeline_mode<synchronous>, transform_indices = @transform_6, window_bounds = array<i64: 160, 64>}, {pipeline_mode = #tpu.pipeline_mode<synchronous>, transform_indices = @transform_7, window_bounds = array<i64: 1, 64>}, {pipeline_mode = #tpu.pipeline_mode<synchronous>, transform_indices = @transform_8, window_bounds = array<i64: 160, 64>}, {pipeline_mode = #tpu.pipeline_mode<synchronous>, transform_indices = @transform_9, window_bounds = array<i64: 1, 64>}, {pipeline_mode = #tpu.pipeline_mode<synchronous>, transform_indices = @transform_10, window_bounds = array<i64: 32, 64>}]} {
    %c0_i32 = arith.constant 0 : i32
    %0 = arith.cmpi eq, %arg0, %c0_i32 : i32
    %1 = arith.extui %0 : i1 to i32
    %c0_i32_0 = arith.constant 0 : i32
    %2 = arith.cmpi ne, %1, %c0_i32_0 : i32
    scf.if %2 {
      %c0_45 = arith.constant 0 : index
      %c0_46 = arith.constant 0 : index
      %75 = vector.load %arg6[%c0_45, %c0_46] : memref<32x64xf32, #tpu.memory_space<vmem>>, vector<32x64xf32>
      %c0_47 = arith.constant 0 : index
      %c0_48 = arith.constant 0 : index
      %76 = vector.load %arg11[%c0_47, %c0_48] : memref<32x64xf32, #tpu.memory_space<vmem>>, vector<32x64xf32>
      tpu.vector_store %arg11[%c0_47, %c0_48], %75 {strides = array<i32>} : memref<32x64xf32, #tpu.memory_space<vmem>>, vector<32x64xf32>,
    } else {
    }
    %c0 = arith.constant 0 : index
    %c0_1 = arith.constant 0 : index
    %3 = vector.load %arg6[%c0, %c0_1] : memref<32x64xf32, #tpu.memory_space<vmem>>, vector<32x64xf32>
    %4 = tpu.iota {dimensions = array<i32: 1>} : vector<128x32xi32>
    %c0_2 = arith.constant 0 : index
    %c0_3 = arith.constant 0 : index
    %5 = vector.load %arg2[%c0_2, %c0_3] : memref<128x1xi32, #tpu.memory_space<vmem>>, vector<128x1xi32>
    %6 = vector.broadcast %5 : vector<128x1xi32> to vector<128x32xi32>
    %7 = arith.cmpi eq, %4, %6 : vector<128x32xi32>
    %8 = arith.extui %7 : vector<128x32xi1> to vector<128x32xi32>
    %9 = arith.sitofp %8 : vector<128x32xi32> to vector<128x32xf32>
    %c0_4 = arith.constant 0 : index
    %c0_5 = arith.constant 0 : index
    %10 = vector.load %arg1[%c0_4, %c0_5] : memref<128x1xi32, #tpu.memory_space<vmem>>, vector<128x1xi32>
    %11 = vector.broadcast %10 : vector<128x1xi32> to vector<128x32xi32>
    %12 = arith.cmpi eq, %4, %11 : vector<128x32xi32>
    %13 = arith.extui %12 : vector<128x32xi1> to vector<128x32xi32>
    %14 = arith.sitofp %13 : vector<128x32xi32> to vector<128x32xf32>
    %cst = arith.constant dense<0.000000e+00> : vector<128x64xf32>
    %15 = tpu.matmul %9, %3, %cst {dimension_numbers = #tpu.dot_dimension_numbers<[1], [0], [0], [1], [0, 0, 1, 1], [], []>} : vector<128x32xf32>, vector<32x64xf32>, vector<128x64xf32> -> vector<128x64xf32>
    %cst_6 = arith.constant dense<0.000000e+00> : vector<128x64xf32>
    %16 = tpu.matmul %14, %3, %cst_6 {dimension_numbers = #tpu.dot_dimension_numbers<[1], [0], [0], [1], [0, 0, 1, 1], [], []>} : vector<128x32xf32>, vector<32x64xf32>, vector<128x64xf32> -> vector<128x64xf32>
    %c0_7 = arith.constant 0 : index
    %c0_8 = arith.constant 0 : index
    %17 = vector.load %arg4[%c0_7, %c0_8] : memref<128x32xf32, #tpu.memory_space<vmem>>, vector<128x32xf32>
    %c0_9 = arith.constant 0 : index
    %c0_10 = arith.constant 0 : index
    %18 = vector.load %arg7[%c0_9, %c0_10] : memref<160x64xf32, #tpu.memory_space<vmem>>, vector<64x64xf32>
    %cst_11 = arith.constant dense<0.000000e+00> : vector<128x64xf32>
    %19 = tpu.matmul %15, %18, %cst_11 {dimension_numbers = #tpu.dot_dimension_numbers<[1], [0], [0], [1], [0, 0, 1, 1], [], []>} : vector<128x64xf32>, vector<64x64xf32>, vector<128x64xf32> -> vector<128x64xf32>
    %c64 = arith.constant 64 : index
    %c0_12 = arith.constant 0 : index
    %20 = vector.load %arg7[%c64, %c0_12] : memref<160x64xf32, #tpu.memory_space<vmem>>, vector<64x64xf32>
    %cst_13 = arith.constant dense<0.000000e+00> : vector<128x64xf32>
    %21 = tpu.matmul %16, %20, %cst_13 {dimension_numbers = #tpu.dot_dimension_numbers<[1], [0], [0], [1], [0, 0, 1, 1], [], []>} : vector<128x64xf32>, vector<64x64xf32>, vector<128x64xf32> -> vector<128x64xf32>
    %22 = arith.addf %19, %21 : vector<128x64xf32>
    %c128 = arith.constant 128 : index
    %c0_14 = arith.constant 0 : index
    %23 = vector.load %arg7[%c128, %c0_14] : memref<160x64xf32, #tpu.memory_space<vmem>>, vector<32x64xf32>
    %cst_15 = arith.constant dense<0.000000e+00> : vector<128x64xf32>
    %24 = tpu.matmul %17, %23, %cst_15 {dimension_numbers = #tpu.dot_dimension_numbers<[1], [0], [0], [1], [0, 0, 1, 1], [], []>} : vector<128x32xf32>, vector<32x64xf32>, vector<128x64xf32> -> vector<128x64xf32>
    %25 = arith.addf %22, %24 : vector<128x64xf32>
    %c0_16 = arith.constant 0 : index
    %c0_17 = arith.constant 0 : index
    %26 = vector.load %arg8[%c0_16, %c0_17] : memref<1x64xf32, #tpu.memory_space<vmem>>, vector<1x64xf32>
    %27 = vector.broadcast %26 : vector<1x64xf32> to vector<128x64xf32>
    %28 = arith.addf %25, %27 : vector<128x64xf32>
    %c0_18 = arith.constant 0 : index
    %c0_19 = arith.constant 0 : index
    %29 = vector.load %arg9[%c0_18, %c0_19] : memref<160x64xf32, #tpu.memory_space<vmem>>, vector<64x64xf32>
    %cst_20 = arith.constant dense<0.000000e+00> : vector<128x64xf32>
    %30 = tpu.matmul %15, %29, %cst_20 {dimension_numbers = #tpu.dot_dimension_numbers<[1], [0], [0], [1], [0, 0, 1, 1], [], []>} : vector<128x64xf32>, vector<64x64xf32>, vector<128x64xf32> -> vector<128x64xf32>
    %c64_21 = arith.constant 64 : index
    %c0_22 = arith.constant 0 : index
    %31 = vector.load %arg9[%c64_21, %c0_22] : memref<160x64xf32, #tpu.memory_space<vmem>>, vector<64x64xf32>
    %cst_23 = arith.constant dense<0.000000e+00> : vector<128x64xf32>
    %32 = tpu.matmul %16, %31, %cst_23 {dimension_numbers = #tpu.dot_dimension_numbers<[1], [0], [0], [1], [0, 0, 1, 1], [], []>} : vector<128x64xf32>, vector<64x64xf32>, vector<128x64xf32> -> vector<128x64xf32>
    %33 = arith.addf %30, %32 : vector<128x64xf32>
    %c128_24 = arith.constant 128 : index
    %c0_25 = arith.constant 0 : index
    %34 = vector.load %arg9[%c128_24, %c0_25] : memref<160x64xf32, #tpu.memory_space<vmem>>, vector<32x64xf32>
    %cst_26 = arith.constant dense<0.000000e+00> : vector<128x64xf32>
    %35 = tpu.matmul %17, %34, %cst_26 {dimension_numbers = #tpu.dot_dimension_numbers<[1], [0], [0], [1], [0, 0, 1, 1], [], []>} : vector<128x32xf32>, vector<32x64xf32>, vector<128x64xf32> -> vector<128x64xf32>
    %36 = arith.addf %33, %35 : vector<128x64xf32>
    %c0_27 = arith.constant 0 : index
    %c0_28 = arith.constant 0 : index
    %37 = vector.load %arg10[%c0_27, %c0_28] : memref<1x64xf32, #tpu.memory_space<vmem>>, vector<1x64xf32>
    %38 = vector.broadcast %37 : vector<1x64xf32> to vector<128x64xf32>
    %39 = arith.addf %36, %38 : vector<128x64xf32>
    %cst_29 = arith.constant 0.000000e+00 : f32
    %40 = vector.broadcast %cst_29 : f32 to vector<128x64xf32>
    %41 = arith.subf %40, %28 : vector<128x64xf32>
    %42 = math.exp %41 : vector<128x64xf32>
    %cst_30 = arith.constant 1.000000e+00 : f32
    %43 = vector.broadcast %cst_30 : f32 to vector<128x64xf32>
    %44 = arith.addf %43, %42 : vector<128x64xf32>
    %cst_31 = arith.constant 1.000000e+00 : f32
    %45 = vector.broadcast %cst_31 : f32 to vector<128x64xf32>
    %46 = arith.divf %45, %44 : vector<128x64xf32>
    %cst_32 = arith.constant 0.000000e+00 : f32
    %47 = vector.broadcast %cst_32 : f32 to vector<128x64xf32>
    %48 = arith.maximumf %39, %47 : vector<128x64xf32>
    %49 = math.absf %39 : vector<128x64xf32>
    %cst_33 = arith.constant 0.000000e+00 : f32
    %50 = vector.broadcast %cst_33 : f32 to vector<128x64xf32>
    %51 = arith.subf %50, %49 : vector<128x64xf32>
    %52 = math.exp %51 : vector<128x64xf32>
    %cst_34 = arith.constant 1.000000e+00 : f32
    %53 = vector.broadcast %cst_34 : f32 to vector<128x64xf32>
    %54 = arith.addf %53, %52 : vector<128x64xf32>
    %55 = math.log %54 : vector<128x64xf32>
    %56 = arith.addf %48, %55 : vector<128x64xf32>
    %57 = arith.mulf %46, %56 : vector<128x64xf32>
    %c0_35 = arith.constant 0 : index
    %c0_36 = arith.constant 0 : index
    %58 = vector.load %arg5[%c0_35, %c0_36] : memref<128x1xf32, #tpu.memory_space<vmem>>, vector<128x1xf32>
    %59 = arith.mulf %58, %58 : vector<128x1xf32>
    %cst_37 = arith.constant -0.055555556 : f32
    %60 = vector.broadcast %cst_37 : f32 to vector<128x1xf32>
    %61 = arith.mulf %59, %60 : vector<128x1xf32>
    %62 = math.exp %61 : vector<128x1xf32>
    %63 = vector.broadcast %62 : vector<128x1xf32> to vector<128x64xf32>
    %64 = arith.mulf %57, %63 : vector<128x64xf32>
    %65 = tpu.iota {dimensions = array<i32: 0>} : vector<32x128xi32>
    %c0_38 = arith.constant 0 : index
    %c0_39 = arith.constant 0 : index
    %66 = vector.load %arg3[%c0_38, %c0_39] : memref<1x128xi32, #tpu.memory_space<vmem>>, vector<1x128xi32>
    %67 = vector.broadcast %66 : vector<1x128xi32> to vector<32x128xi32>
    %68 = arith.cmpi eq, %65, %67 : vector<32x128xi32>
    %69 = arith.extui %68 : vector<32x128xi1> to vector<32x128xi32>
    %70 = arith.sitofp %69 : vector<32x128xi32> to vector<32x128xf32>
    %c0_40 = arith.constant 0 : index
    %c0_41 = arith.constant 0 : index
    %71 = vector.load %arg11[%c0_40, %c0_41] : memref<32x64xf32, #tpu.memory_space<vmem>>, vector<32x64xf32>
    %cst_42 = arith.constant dense<0.000000e+00> : vector<32x64xf32>
    %72 = tpu.matmul %70, %64, %cst_42 {dimension_numbers = #tpu.dot_dimension_numbers<[1], [0], [0], [1], [0, 0, 1, 1], [], []>} : vector<32x128xf32>, vector<128x64xf32>, vector<32x64xf32> -> vector<32x64xf32>
    %73 = arith.addf %71, %72 : vector<32x64xf32>
    %c0_43 = arith.constant 0 : index
    %c0_44 = arith.constant 0 : index
    %74 = vector.load %arg11[%c0_43, %c0_44] : memref<32x64xf32, #tpu.memory_space<vmem>>, vector<32x64xf32>
    tpu.vector_store %arg11[%c0_43, %c0_44], %73 {strides = array<i32>} : memref<32x64xf32, #tpu.memory_space<vmem>>, vector<32x64xf32>,
    return
  }
  func.func @transform_0(%arg0: i32) -> (i32, i32) {
    %c0_i32 = arith.constant 0 : i32
    %c0_i32_0 = arith.constant 0 : i32
    return %arg0, %c0_i32 : i32, i32
  }
  func.func @transform_1(%arg0: i32) -> (i32, i32) {
    %c0_i32 = arith.constant 0 : i32
    %c0_i32_0 = arith.constant 0 : i32
    return %arg0, %c0_i32 : i32, i32
  }
  func.func @transform_2(%arg0: i32) -> (i32, i32) {
    %c0_i32 = arith.constant 0 : i32
    %c0_i32_0 = arith.constant 0 : i32
    return %c0_i32, %arg0 : i32, i32
  }
  func.func @transform_3(%arg0: i32) -> (i32, i32) {
    %c0_i32 = arith.constant 0 : i32
    %c0_i32_0 = arith.constant 0 : i32
    return %arg0, %c0_i32 : i32, i32
  }
  func.func @transform_4(%arg0: i32) -> (i32, i32) {
    %c0_i32 = arith.constant 0 : i32
    %c0_i32_0 = arith.constant 0 : i32
    return %arg0, %c0_i32 : i32, i32
  }
  func.func @transform_5(%arg0: i32) -> (i32, i32) {
    %c0_i32 = arith.constant 0 : i32
    %c0_i32_0 = arith.constant 0 : i32
    %c0_i32_1 = arith.constant 0 : i32
    return %c0_i32, %c0_i32_0 : i32, i32
  }
  func.func @transform_6(%arg0: i32) -> (i32, i32) {
    %c0_i32 = arith.constant 0 : i32
    %c0_i32_0 = arith.constant 0 : i32
    %c0_i32_1 = arith.constant 0 : i32
    return %c0_i32, %c0_i32_0 : i32, i32
  }
  func.func @transform_7(%arg0: i32) -> (i32, i32) {
    %c0_i32 = arith.constant 0 : i32
    %c0_i32_0 = arith.constant 0 : i32
    %c0_i32_1 = arith.constant 0 : i32
    return %c0_i32, %c0_i32_0 : i32, i32
  }
  func.func @transform_8(%arg0: i32) -> (i32, i32) {
    %c0_i32 = arith.constant 0 : i32
    %c0_i32_0 = arith.constant 0 : i32
    %c0_i32_1 = arith.constant 0 : i32
    return %c0_i32, %c0_i32_0 : i32, i32
  }
  func.func @transform_9(%arg0: i32) -> (i32, i32) {
    %c0_i32 = arith.constant 0 : i32
    %c0_i32_0 = arith.constant 0 : i32
    %c0_i32_1 = arith.constant 0 : i32
    return %c0_i32, %c0_i32_0 : i32, i32
  }
  func.func @transform_10(%arg0: i32) -> (i32, i32) {
    %c0_i32 = arith.constant 0 : i32
    %c0_i32_0 = arith.constant 0 : i32
    %c0_i32_1 = arith.constant 0 : i32
    return %c0_i32, %c0_i32_0 : i32, i32
  }
}

</mosaic_0001>

<llo_original>
// kernel: tpu_custom_call.1
$region0: #{tpu_custom_call.1}
  #allocation0 [shape = 'u32[]', space=smem, size = 0x4, offset = 0x4, fixed_abs, tag = 'smem constant byte address 0x4 - core index']
  #allocation1 [shape = 'u32[144,128]{1,0:T(1,128)}', space=vmem, size = 0x12000, scoped, tag = 'internal scratch']
  %s0 = inlined_call_operand.vmem [shape: s32[256,1], index: 0, kind: input, shape index: {}]
  %s1 = inlined_call_operand.vmem [shape: s32[256,1], index: 1, kind: input, shape index: {}]
  %s2 = inlined_call_operand.vmem [shape: s32[1,256], index: 2, kind: input, shape index: {}]
  %s3 = inlined_call_operand.vmem [shape: f32[256,32], index: 3, kind: input, shape index: {}]
  %s4 = inlined_call_operand.vmem [shape: f32[256,1], index: 4, kind: input, shape index: {}]
  %s5 = inlined_call_operand.vmem [shape: f32[32,64], index: 5, kind: input, shape index: {}]
  %s6 = inlined_call_operand.vmem [shape: f32[160,64], index: 6, kind: input, shape index: {}]
  %s7 = inlined_call_operand.vmem [shape: f32[1,64], index: 7, kind: input, shape index: {}]
  %s8 = inlined_call_operand.vmem [shape: f32[160,64], index: 8, kind: input, shape index: {}]
  %s9 = inlined_call_operand.vmem [shape: f32[1,64], index: 9, kind: input, shape index: {}]
  %s10 = inlined_call_operand.hbm [shape: f32[32,64], index: 10, kind: output, shape index: {}]
  %s11 = sld [smem:[#allocation0]]
  $region77: #{tpu_custom_call.1} parent=0
    _
  %s13 = ssub.s32 1, %s11
  %s14 = scalar_select 0, %s13, %s11
  $region1: #{tpu_custom_call.1} parent=0
    #allocation2 [shape = 'u8[16384]{0}', space=vmem, size = 0x4000, scoped, tag = 'output window, operand 0, single buffered']
    #allocation3 [shape = 's32[2]{0}', space=sflag, size = 0x8, scoped, tag = 'scoped memory for tpu_custom_call.1']
    %15 = vsyncpa [#allocation3], 0
    loop: start=0, step=1, limit=4
    $region2: #{tpu_custom_call.1} parent=1 // loop_pre_header
      _
    $region3: #{tpu_custom_call.1} parent=1 // loop_header
      %s17 = sphi 0, %s21
      %p18 = scmp.ge.s32.totalorder %s17, 4
      %s27 = sphi 0, %s29
      %s30 = sphi 0, %s27
      %s31 = sphi 0, %s30
      %s47 = sphi 0, %s31
      %s53 = sphi 0, %s55
      %s56 = sphi 0, %s53
      %s57 = sphi 0, %s56
      %s73 = sphi 0, %s57
      %s79 = sphi 0, %s81
      %s82 = sphi 0, %s79
      %s83 = sphi 0, %s82
      %s99 = sphi 0, %s83
      %s105 = sphi 0, %s107
      %s108 = sphi 0, %s105
      %s109 = sphi 0, %s108
      %s125 = sphi 0, %s109
      %s131 = sphi 0, %s133
      %s134 = sphi 0, %s131
      %s135 = sphi 0, %s134
      %s151 = sphi 0, %s135
      %s155 = sphi 0, %s155
      %s157 = sphi 0, %s155
      %s158 = sphi 0, %s157
      %s172 = sphi 0, %s158
      %s176 = sphi 0, %s176
      %s178 = sphi 0, %s176
      %s179 = sphi 0, %s178
      %s193 = sphi 0, %s179
      %s197 = sphi 0, %s197
      %s199 = sphi 0, %s197
      %s200 = sphi 0, %s199
      %s214 = sphi 0, %s200
      %s218 = sphi 0, %s218
      %s220 = sphi 0, %s218
      %s221 = sphi 0, %s220
      %s235 = sphi 0, %s221
      %s239 = sphi 0, %s239
      %s241 = sphi 0, %s239
      %s242 = sphi 0, %s241
      %s256 = sphi 0, %s242
      %s260 = sphi 0, %s260
      %s262 = sphi 0, %s260
      %s263 = sphi 0, %s262
      %s277 = sphi 0, %s263
    $region4: #{tpu_custom_call.1} parent=1 // loop_header_branch
      %20 = sbr.rel (%p18) target = $region8
    $region5: #{tpu_custom_call.1} parent=1 // loop_body
      %s22 = ssub.s32 %s17, 1
      %s23 = ssub.s32 %s17, 2
      %s24 = sadd.s32 %s17, 1
      %s25 = ssub.s32 %s17, %s24
      %p26 = scmp.eq.s32.totalorder %s25, 0
      %s28 = sadd.s32 %s27, 1
      %s29 = scalar_select %p26, %s27, %s28
      %p32 = pneg %p26
      %p33 = scmp.eq.s32.totalorder %s17, 1
      %p34 = por %p32, %p33
      %p35 = scmp.ne.s32.totalorder %s27, %s30
      %p36 = scmp.eq.s32.totalorder %s17, 0
      %p37 = por %p35, %p36
      %p38 = scmp.ne.s32.totalorder %s27, %s30
      %p39 = scmp.eq.s32.totalorder %s22, 1
      %p40 = por %p38, %p39
      %p41 = scmp.ne.s32.totalorder %s30, %s31
      %p42 = scmp.eq.s32.totalorder %s22, 0
      %p43 = por %p41, %p42
      %p44 = scmp.ne.s32.totalorder %s30, %s31
      %p45 = scmp.eq.s32.totalorder %s23, 1
      %p46 = por %p44, %p45
      %p48 = scmp.ne.s32.totalorder %s31, %s47
      %p49 = scmp.eq.s32.totalorder %s23, 0
      %p50 = por %p48, %p49
      %s51 = ssub.s32 %s17, %s24
      %p52 = scmp.eq.s32.totalorder %s51, 0
      %s54 = sadd.s32 %s53, 1
      %s55 = scalar_select %p52, %s53, %s54
      %p58 = pneg %p52
      %p59 = scmp.eq.s32.totalorder %s17, 1
      %p60 = por %p58, %p59
      %p61 = scmp.ne.s32.totalorder %s53, %s56
      %p62 = scmp.eq.s32.totalorder %s17, 0
      %p63 = por %p61, %p62
      %p64 = scmp.ne.s32.totalorder %s53, %s56
      %p65 = scmp.eq.s32.totalorder %s22, 1
      %p66 = por %p64, %p65
      %p67 = scmp.ne.s32.totalorder %s56, %s57
      %p68 = scmp.eq.s32.totalorder %s22, 0
      %p69 = por %p67, %p68
      %p70 = scmp.ne.s32.totalorder %s56, %s57
      %p71 = scmp.eq.s32.totalorder %s23, 1
      %p72 = por %p70, %p71
      %p74 = scmp.ne.s32.totalorder %s57, %s73
      %p75 = scmp.eq.s32.totalorder %s23, 0
      %p76 = por %p74, %p75
      %s77 = ssub.s32 %s17, %s24
      %p78 = scmp.eq.s32.totalorder %s77, 0
      %s80 = sadd.s32 %s79, 1
      %s81 = scalar_select %p78, %s79, %s80
      %p84 = pneg %p78
      %p85 = scmp.eq.s32.totalorder %s17, 1
      %p86 = por %p84, %p85
      %p87 = scmp.ne.s32.totalorder %s79, %s82
      %p88 = scmp.eq.s32.totalorder %s17, 0
      %p89 = por %p87, %p88
      %p90 = scmp.ne.s32.totalorder %s79, %s82
      %p91 = scmp.eq.s32.totalorder %s22, 1
      %p92 = por %p90, %p91
      %p93 = scmp.ne.s32.totalorder %s82, %s83
      %p94 = scmp.eq.s32.totalorder %s22, 0
      %p95 = por %p93, %p94
      %p96 = scmp.ne.s32.totalorder %s82, %s83
      %p97 = scmp.eq.s32.totalorder %s23, 1
      %p98 = por %p96, %p97
      %p100 = scmp.ne.s32.totalorder %s83, %s99
      %p101 = scmp.eq.s32.totalorder %s23, 0
      %p102 = por %p100, %p101
      %s103 = ssub.s32 %s17, %s24
      %p104 = scmp.eq.s32.totalorder %s103, 0
      %s106 = sadd.s32 %s105, 1
      %s107 = scalar_select %p104, %s105, %s106
      %p110 = pneg %p104
      %p111 = scmp.eq.s32.totalorder %s17, 1
      %p112 = por %p110, %p111
      %p113 = scmp.ne.s32.totalorder %s105, %s108
      %p114 = scmp.eq.s32.totalorder %s17, 0
      %p115 = por %p113, %p114
      %p116 = scmp.ne.s32.totalorder %s105, %s108
      %p117 = scmp.eq.s32.totalorder %s22, 1
      %p118 = por %p116, %p117
      %p119 = scmp.ne.s32.totalorder %s108, %s109
      %p120 = scmp.eq.s32.totalorder %s22, 0
      %p121 = por %p119, %p120
      %p122 = scmp.ne.s32.totalorder %s108, %s109
      %p123 = scmp.eq.s32.totalorder %s23, 1
      %p124 = por %p122, %p123
      %p126 = scmp.ne.s32.totalorder %s109, %s125
      %p127 = scmp.eq.s32.totalorder %s23, 0
      %p128 = por %p126, %p127
      %s129 = ssub.s32 %s17, %s24
      %p130 = scmp.eq.s32.totalorder %s129, 0
      %s132 = sadd.s32 %s131, 1
      %s133 = scalar_select %p130, %s131, %s132
      %p136 = pneg %p130
      %p137 = scmp.eq.s32.totalorder %s17, 1
      %p138 = por %p136, %p137
      %p139 = scmp.ne.s32.totalorder %s131, %s134
      %p140 = scmp.eq.s32.totalorder %s17, 0
      %p141 = por %p139, %p140
      %p142 = scmp.ne.s32.totalorder %s131, %s134
      %p143 = scmp.eq.s32.totalorder %s22, 1
      %p144 = por %p142, %p143
      %p145 = scmp.ne.s32.totalorder %s134, %s135
      %p146 = scmp.eq.s32.totalorder %s22, 0
      %p147 = por %p145, %p146
      %p148 = scmp.ne.s32.totalorder %s134, %s135
      %p149 = scmp.eq.s32.totalorder %s23, 1
      %p150 = por %p148, %p149
      %p152 = scmp.ne.s32.totalorder %s135, %s151
      %p153 = scmp.eq.s32.totalorder %s23, 0
      %p154 = por %p152, %p153
      %s156 = sadd.s32 %s155, 1
      %p159 = scmp.eq.s32.totalorder %s17, 1
      %p160 = scmp.ne.s32.totalorder %s155, %s157
      %p161 = scmp.eq.s32.totalorder %s17, 0
      %p162 = por %p160, %p161
      %p163 = scmp.ne.s32.totalorder %s155, %s157
      %p164 = scmp.eq.s32.totalorder %s22, 1
      %p165 = por %p163, %p164
      %p166 = scmp.ne.s32.totalorder %s157, %s158
      %p167 = scmp.eq.s32.totalorder %s22, 0
      %p168 = por %p166, %p167
      %p169 = scmp.ne.s32.totalorder %s157, %s158
      %p170 = scmp.eq.s32.totalorder %s23, 1
      %p171 = por %p169, %p170
      %p173 = scmp.ne.s32.totalorder %s158, %s172
      %p174 = scmp.eq.s32.totalorder %s23, 0
      %p175 = por %p173, %p174
      %s177 = sadd.s32 %s176, 1
      %p180 = scmp.eq.s32.totalorder %s17, 1
      %p181 = scmp.ne.s32.totalorder %s176, %s178
      %p182 = scmp.eq.s32.totalorder %s17, 0
      %p183 = por %p181, %p182
      %p184 = scmp.ne.s32.totalorder %s176, %s178
      %p185 = scmp.eq.s32.totalorder %s22, 1
      %p186 = por %p184, %p185
      %p187 = scmp.ne.s32.totalorder %s178, %s179
      %p188 = scmp.eq.s32.totalorder %s22, 0
      %p189 = por %p187, %p188
      %p190 = scmp.ne.s32.totalorder %s178, %s179
      %p191 = scmp.eq.s32.totalorder %s23, 1
      %p192 = por %p190, %p191
      %p194 = scmp.ne.s32.totalorder %s179, %s193
      %p195 = scmp.eq.s32.totalorder %s23, 0
      %p196 = por %p194, %p195
      %s198 = sadd.s32 %s197, 1
      %p201 = scmp.eq.s32.totalorder %s17, 1
      %p202 = scmp.ne.s32.totalorder %s197, %s199
      %p203 = scmp.eq.s32.totalorder %s17, 0
      %p204 = por %p202, %p203
      %p205 = scmp.ne.s32.totalorder %s197, %s199
      %p206 = scmp.eq.s32.totalorder %s22, 1
      %p207 = por %p205, %p206
      %p208 = scmp.ne.s32.totalorder %s199, %s200
      %p209 = scmp.eq.s32.totalorder %s22, 0
      %p210 = por %p208, %p209
      %p211 = scmp.ne.s32.totalorder %s199, %s200
      %p212 = scmp.eq.s32.totalorder %s23, 1
      %p213 = por %p211, %p212
      %p215 = scmp.ne.s32.totalorder %s200, %s214
      %p216 = scmp.eq.s32.totalorder %s23, 0
      %p217 = por %p215, %p216
      %s219 = sadd.s32 %s218, 1
      %p222 = scmp.eq.s32.totalorder %s17, 1
      %p223 = scmp.ne.s32.totalorder %s218, %s220
      %p224 = scmp.eq.s32.totalorder %s17, 0
      %p225 = por %p223, %p224
      %p226 = scmp.ne.s32.totalorder %s218, %s220
      %p227 = scmp.eq.s32.totalorder %s22, 1
      %p228 = por %p226, %p227
      %p229 = scmp.ne.s32.totalorder %s220, %s221
      %p230 = scmp.eq.s32.totalorder %s22, 0
      %p231 = por %p229, %p230
      %p232 = scmp.ne.s32.totalorder %s220, %s221
      %p233 = scmp.eq.s32.totalorder %s23, 1
      %p234 = por %p232, %p233
      %p236 = scmp.ne.s32.totalorder %s221, %s235
      %p237 = scmp.eq.s32.totalorder %s23, 0
      %p238 = por %p236, %p237
      %s240 = sadd.s32 %s239, 1
      %p243 = scmp.eq.s32.totalorder %s17, 1
      %p244 = scmp.ne.s32.totalorder %s239, %s241
      %p245 = scmp.eq.s32.totalorder %s17, 0
      %p246 = por %p244, %p245
      %p247 = scmp.ne.s32.totalorder %s239, %s241
      %p248 = scmp.eq.s32.totalorder %s22, 1
      %p249 = por %p247, %p248
      %p250 = scmp.ne.s32.totalorder %s241, %s242
      %p251 = scmp.eq.s32.totalorder %s22, 0
      %p252 = por %p250, %p251
      %p253 = scmp.ne.s32.totalorder %s241, %s242
      %p254 = scmp.eq.s32.totalorder %s23, 1
      %p255 = por %p253, %p254
      %p257 = scmp.ne.s32.totalorder %s242, %s256
      %p258 = scmp.eq.s32.totalorder %s23, 0
      %p259 = por %p257, %p258
      %s261 = sadd.s32 %s260, 1
      %p264 = scmp.eq.s32.totalorder %s17, 1
      %p265 = scmp.ne.s32.totalorder %s260, %s262
      %p266 = scmp.eq.s32.totalorder %s17, 0
      %p267 = por %p265, %p266
      %p268 = scmp.ne.s32.totalorder %s260, %s262
      %p269 = scmp.eq.s32.totalorder %s22, 1
      %p270 = por %p268, %p269
      %p271 = scmp.ne.s32.totalorder %s262, %s263
      %p272 = scmp.eq.s32.totalorder %s22, 0
      %p273 = por %p271, %p272
      %p274 = scmp.ne.s32.totalorder %s262, %s263
      %p275 = scmp.eq.s32.totalorder %s23, 1
      %p276 = por %p274, %p275
      %p278 = scmp.ne.s32.totalorder %s263, %s277
      %p279 = scmp.eq.s32.totalorder %s23, 0
      %p280 = por %p278, %p279
      %p281 = scmp.le.s32.totalorder 1, %s17
      %p282 = scmp.lt.s32.totalorder %s17, 3
      %p283 = pnand %p281, %p282
      %p284 = pneg %p283
      // Predicated region
      $region9: #{tpu_custom_call.1} parent=5 // pred_check
        _
      $region10: #{tpu_custom_call.1} parent=5 // pred_check_branch
        %286 = sbr.rel (%p283) target = $region12
      $region11: #{tpu_custom_call.1} parent=5 // pred_region
        %s287 = ssub.s32 %s17, 1
        // Predicated region
        $region13: #{tpu_custom_call.1} parent=11 // pred_check
          %p288 = pneg %p168
        $region14: #{tpu_custom_call.1} parent=11 // pred_check_branch
          %290 = sbr.rel (%p288) target = $region16
        $region15: #{tpu_custom_call.1} parent=11 // pred_region
          _
        $region16: #{tpu_custom_call.1} parent=11 // pred_fallthru
          _
        // Predicated region
        $region17: #{tpu_custom_call.1} parent=11 // pred_check
          %p291 = pneg %p189
        $region18: #{tpu_custom_call.1} parent=11 // pred_check_branch
          %293 = sbr.rel (%p291) target = $region20
        $region19: #{tpu_custom_call.1} parent=11 // pred_region
          _
        $region20: #{tpu_custom_call.1} parent=11 // pred_fallthru
          _
        // Predicated region
        $region21: #{tpu_custom_call.1} parent=11 // pred_check
          %p294 = pneg %p210
        $region22: #{tpu_custom_call.1} parent=11 // pred_check_branch
          %296 = sbr.rel (%p294) target = $region24
        $region23: #{tpu_custom_call.1} parent=11 // pred_region
          _
        $region24: #{tpu_custom_call.1} parent=11 // pred_fallthru
          _
        // Predicated region
        $region25: #{tpu_custom_call.1} parent=11 // pred_check
          %p297 = pneg %p231
        $region26: #{tpu_custom_call.1} parent=11 // pred_check_branch
          %299 = sbr.rel (%p297) target = $region28
        $region27: #{tpu_custom_call.1} parent=11 // pred_region
          _
        $region28: #{tpu_custom_call.1} parent=11 // pred_fallthru
          _
        // Predicated region
        $region29: #{tpu_custom_call.1} parent=11 // pred_check
          %p300 = pneg %p252
        $region30: #{tpu_custom_call.1} parent=11 // pred_check_branch
          %302 = sbr.rel (%p300) target = $region32
        $region31: #{tpu_custom_call.1} parent=11 // pred_region
          _
        $region32: #{tpu_custom_call.1} parent=11 // pred_fallthru
          _
      $region12: #{tpu_custom_call.1} parent=5 // pred_fallthru
        _
      %p303 = scmp.lt.s32.totalorder %s17, 2
      // Predicated region
      $region33: #{tpu_custom_call.1} parent=5 // pred_check
        %p304 = pneg %p303
      $region34: #{tpu_custom_call.1} parent=5 // pred_check_branch
        %306 = sbr.rel (%p304) target = $region36
      $region35: #{tpu_custom_call.1} parent=5 // pred_region
        // Predicated region
        $region37: #{tpu_custom_call.1} parent=35 // pred_check
          %p307 = pneg %p37
        $region38: #{tpu_custom_call.1} parent=35 // pred_check_branch
          %309 = sbr.rel (%p307) target = $region40
        $region39: #{tpu_custom_call.1} parent=35 // pred_region
          %s310 = smul.u32 16, %s17
          %p311 = scmp.lt.s32.totalorder %s310, 31
          %s312 = scalar_select %p311, %s310, 31
          %s313 = smul.addr %s312, 8
          %s314 = scalar_lea.vmem %s0, %s313
          %s315 = smul.u32 16, %s17
        $region40: #{tpu_custom_call.1} parent=35 // pred_fallthru
          _
        // Predicated region
        $region41: #{tpu_custom_call.1} parent=35 // pred_check
          %p316 = pneg %p63
        $region42: #{tpu_custom_call.1} parent=35 // pred_check_branch
          %318 = sbr.rel (%p316) target = $region44
        $region43: #{tpu_custom_call.1} parent=35 // pred_region
          %s319 = smul.u32 16, %s17
          %p320 = scmp.lt.s32.totalorder %s319, 31
          %s321 = scalar_select %p320, %s319, 31
          %s322 = smul.addr %s321, 8
          %s323 = scalar_lea.vmem %s1, %s322
          %s324 = smul.u32 16, %s17
        $region44: #{tpu_custom_call.1} parent=35 // pred_fallthru
          _
        // Predicated region
        $region45: #{tpu_custom_call.1} parent=35 // pred_check
          %p325 = pneg %p89
        $region46: #{tpu_custom_call.1} parent=35 // pred_check_branch
          %327 = sbr.rel (%p325) target = $region48
        $region47: #{tpu_custom_call.1} parent=35 // pred_region
          %p328 = scmp.lt.s32.totalorder %s17, 1
          %s329 = scalar_select %p328, %s17, 1
          %s330 = scalar_lea.vmem %s2, %s329
        $region48: #{tpu_custom_call.1} parent=35 // pred_fallthru
          _
        // Predicated region
        $region49: #{tpu_custom_call.1} parent=35 // pred_check
          %p331 = pneg %p115
        $region50: #{tpu_custom_call.1} parent=35 // pred_check_branch
          %333 = sbr.rel (%p331) target = $region52
        $region51: #{tpu_custom_call.1} parent=35 // pred_region
          %s334 = smul.u32 16, %s17
          %p335 = scmp.lt.s32.totalorder %s334, 31
          %s336 = scalar_select %p335, %s334, 31
          %s337 = smul.addr %s336, 8
          %s338 = scalar_lea.vmem %s3, %s337
          %s339 = smul.u32 16, %s17
        $region52: #{tpu_custom_call.1} parent=35 // pred_fallthru
          _
        // Predicated region
        $region53: #{tpu_custom_call.1} parent=35 // pred_check
          %p340 = pneg %p141
        $region54: #{tpu_custom_call.1} parent=35 // pred_check_branch
          %342 = sbr.rel (%p340) target = $region56
        $region55: #{tpu_custom_call.1} parent=35 // pred_region
          %s343 = smul.u32 16, %s17
          %p344 = scmp.lt.s32.totalorder %s343, 31
          %s345 = scalar_select %p344, %s343, 31
          %s346 = smul.addr %s345, 8
          %s347 = scalar_lea.vmem %s4, %s346
          %s348 = smul.u32 16, %s17
        $region56: #{tpu_custom_call.1} parent=35 // pred_fallthru
          _
      $region36: #{tpu_custom_call.1} parent=5 // pred_fallthru
        _
      %p349 = scmp.le.s32.totalorder 1, %s17
      %p350 = scmp.lt.s32.totalorder %s17, 3
      %p351 = pnand %p349, %p350
      %p352 = pneg %p351
      // Predicated region
      $region57: #{tpu_custom_call.1} parent=5 // pred_check
        _
      $region58: #{tpu_custom_call.1} parent=5 // pred_check_branch
        %354 = sbr.rel (%p351) target = $region60
      $region59: #{tpu_custom_call.1} parent=5 // pred_region
        %s355 = ssub.s32 %s17, 1
        %s356 = smul.u32 16, %s22
        %p357 = scmp.lt.s32.totalorder %s356, 31
        %s358 = scalar_select %p357, %s356, 31
        %s359 = smul.addr %s358, 8
        %s360 = scalar_lea.vmem %s0, %s359
        %p361 = pneg %p43
        %p362 = pneg %p40
        %s363 = smul.u32 16, %s22
        %p364 = scmp.lt.s32.totalorder %s363, 31
        %s365 = scalar_select %p364, %s363, 31
        %s366 = smul.addr %s365, 8
        %s367 = scalar_lea.vmem %s1, %s366
        %p368 = pneg %p69
        %p369 = pneg %p66
        %p370 = scmp.lt.s32.totalorder %s22, 1
        %s371 = scalar_select %p370, %s22, 1
        %s372 = scalar_lea.vmem %s2, %s371
        %p373 = pneg %p95
        %p374 = pneg %p92
        %s375 = smul.u32 16, %s22
        %p376 = scmp.lt.s32.totalorder %s375, 31
        %s377 = scalar_select %p376, %s375, 31
        %s378 = smul.addr %s377, 8
        %s379 = scalar_lea.vmem %s3, %s378
        %p380 = pneg %p121
        %p381 = pneg %p118
        %s382 = smul.u32 16, %s22
        %p383 = scmp.lt.s32.totalorder %s382, 31
        %s384 = scalar_select %p383, %s382, 31
        %s385 = smul.addr %s384, 8
        %s386 = scalar_lea.vmem %s4, %s385
        %p387 = pneg %p147
        %p388 = pneg %p144
        %p389 = pneg %p168
        %p390 = pneg %p165
        %p391 = pneg %p189
        %p392 = pneg %p186
        %p393 = pneg %p210
        %p394 = pneg %p207
        %p395 = pneg %p231
        %p396 = pneg %p228
        %p397 = pneg %p252
        %p398 = pneg %p249
        %p399 = pneg %p273
        %p400 = pneg %p270
        %s401 = smul.u32 16, %s22
        %p402 = scmp.lt.s32.totalorder %s401, 31
        %s403 = scalar_select %p402, %s401, 31
        %s404 = smul.addr %s403, 8
        %s405 = scalar_lea.vmem %s0, %s404
        %s406 = smul.u32 16, %s22
        %s407 = smul.u32 16, %s22
        %p408 = scmp.lt.s32.totalorder %s407, 31
        %s409 = scalar_select %p408, %s407, 31
        %s410 = smul.addr %s409, 8
        %s411 = scalar_lea.vmem %s1, %s410
        %s412 = smul.u32 16, %s22
        %p413 = scmp.lt.s32.totalorder %s22, 1
        %s414 = scalar_select %p413, %s22, 1
        %s415 = scalar_lea.vmem %s2, %s414
        %s416 = smul.u32 16, %s22
        %p417 = scmp.lt.s32.totalorder %s416, 31
        %s418 = scalar_select %p417, %s416, 31
        %s419 = smul.addr %s418, 8
        %s420 = scalar_lea.vmem %s3, %s419
        %s421 = smul.u32 16, %s22
        %s422 = smul.u32 16, %s22
        %p423 = scmp.lt.s32.totalorder %s422, 31
        %s424 = scalar_select %p423, %s422, 31
        %s425 = smul.addr %s424, 8
        %s426 = scalar_lea.vmem %s4, %s425
        %s427 = smul.u32 16, %s22
        %p428 = scmp.eq.s32.totalorder %s22, 0
        // Predicated region
        $region61: #{tpu_custom_call.1} parent=59 // pred_check
          %p429 = pneg %p428
        $region62: #{tpu_custom_call.1} parent=59 // pred_check_branch
          %431 = sbr.rel (%p429) target = $region64
        $region63: #{tpu_custom_call.1} parent=59 // pred_region
          %v432 = vld [vmem:[%s5] sm:$0xff]
          %v433 = vld [vmem:[%s5 + $0x8] sm:$0xff]
          %v434 = vld [vmem:[%s5 + $0x10] sm:$0xff]
          %v435 = vld [vmem:[%s5 + $0x18] sm:$0xff]
          %vm436 = vcmask 523264
          %437 = vst.msk [vmem:[#allocation2] sm:$0xff] %vm436, %v432
          %438 = vst.msk [vmem:[#allocation2 + $0x8] sm:$0xff] %vm436, %v433
          %439 = vst.msk [vmem:[#allocation2 + $0x10] sm:$0xff] %vm436, %v434
          %440 = vst.msk [vmem:[#allocation2 + $0x18] sm:$0xff] %vm436, %v435
        $region64: #{tpu_custom_call.1} parent=59 // pred_fallthru
          _
        %v441 = vld [vmem:[%s5] sm:$0xff]
        %v442 = vld [vmem:[%s5 + $0x8] sm:$0xff]
        %v443 = vld [vmem:[%s5 + $0x10] sm:$0xff]
        %v444 = vld [vmem:[%s5 + $0x18] sm:$0xff]
        %v445 = vlaneseq
        %v446 = vand.u32 %v445, 127
        %v447 = vld [vmem:[%s411] sm:$0xff]
        %v448 = vld [vmem:[%s411 + $0x8] sm:$0xff]
        %v449 = vld [vmem:[%s411 + $0x10] sm:$0xff]
        %v450 = vld [vmem:[%s411 + $0x18] sm:$0xff]
        %v451 = vld [vmem:[%s411 + $0x20] sm:$0xff]
        %v452 = vld [vmem:[%s411 + $0x28] sm:$0xff]
        %v453 = vld [vmem:[%s411 + $0x30] sm:$0xff]
        %v454 = vld [vmem:[%s411 + $0x38] sm:$0xff]
        %v455 = vld [vmem:[%s411 + $0x40] sm:$0xff]
        %v456 = vld [vmem:[%s411 + $0x48] sm:$0xff]
        %v457 = vld [vmem:[%s411 + $0x50] sm:$0xff]
        %v458 = vld [vmem:[%s411 + $0x58] sm:$0xff]
        %v459 = vld [vmem:[%s411 + $0x60] sm:$0xff]
        %v460 = vld [vmem:[%s411 + $0x68] sm:$0xff]
        %v461 = vld [vmem:[%s411 + $0x70] sm:$0xff]
        %v462 = vld [vmem:[%s411 + $0x78] sm:$0xff]
        %463 = vset.pattern.permute.xlu0 0
        %464 = vperm.xlu0 %463, %v447
        %v465 = vpop.permute.xlu0 %464
        %466 = vset.pattern.permute.xlu0 0
        %467 = vperm.xlu0 %466, %v448
        %v468 = vpop.permute.xlu0 %467
        %469 = vset.pattern.permute.xlu0 0
        %470 = vperm.xlu0 %469, %v449
        %v471 = vpop.permute.xlu0 %470
        %472 = vset.pattern.permute.xlu0 0
        %473 = vperm.xlu0 %472, %v450
        %v474 = vpop.permute.xlu0 %473
        %475 = vset.pattern.permute.xlu0 0
        %476 = vperm.xlu0 %475, %v451
        %v477 = vpop.permute.xlu0 %476
        %478 = vset.pattern.permute.xlu0 0
        %479 = vperm.xlu0 %478, %v452
        %v480 = vpop.permute.xlu0 %479
        %481 = vset.pattern.permute.xlu0 0
        %482 = vperm.xlu0 %481, %v453
        %v483 = vpop.permute.xlu0 %482
        %484 = vset.pattern.permute.xlu0 0
        %485 = vperm.xlu0 %484, %v454
        %v486 = vpop.permute.xlu0 %485
        %487 = vset.pattern.permute.xlu0 0
        %488 = vperm.xlu0 %487, %v455
        %v489 = vpop.permute.xlu0 %488
        %490 = vset.pattern.permute.xlu0 0
        %491 = vperm.xlu0 %490, %v456
        %v492 = vpop.permute.xlu0 %491
        %493 = vset.pattern.permute.xlu0 0
        %494 = vperm.xlu0 %493, %v457
        %v495 = vpop.permute.xlu0 %494
        %496 = vset.pattern.permute.xlu0 0
        %497 = vperm.xlu0 %496, %v458
        %v498 = vpop.permute.xlu0 %497
        %499 = vset.pattern.permute.xlu0 0
        %500 = vperm.xlu0 %499, %v459
        %v501 = vpop.permute.xlu0 %500
        %502 = vset.pattern.permute.xlu0 0
        %503 = vperm.xlu0 %502, %v460
        %v504 = vpop.permute.xlu0 %503
        %505 = vset.pattern.permute.xlu0 0
        %506 = vperm.xlu0 %505, %v461
        %v507 = vpop.permute.xlu0 %506
        %508 = vset.pattern.permute.xlu0 0
        %509 = vperm.xlu0 %508, %v462
        %v510 = vpop.permute.xlu0 %509
        %vm511 = vcmp.eq.s32.totalorder %v446, %v465
        %vm512 = vcmp.eq.s32.totalorder %v446, %v468
        %vm513 = vcmp.eq.s32.totalorder %v446, %v471
        %vm514 = vcmp.eq.s32.totalorder %v446, %v474
        %vm515 = vcmp.eq.s32.totalorder %v446, %v477
        %vm516 = vcmp.eq.s32.totalorder %v446, %v480
        %vm517 = vcmp.eq.s32.totalorder %v446, %v483
        %vm518 = vcmp.eq.s32.totalorder %v446, %v486
        %vm519 = vcmp.eq.s32.totalorder %v446, %v489
        %vm520 = vcmp.eq.s32.totalorder %v446, %v492
        %vm521 = vcmp.eq.s32.totalorder %v446, %v495
        %vm522 = vcmp.eq.s32.totalorder %v446, %v498
        %vm523 = vcmp.eq.s32.totalorder %v446, %v501
        %vm524 = vcmp.eq.s32.totalorder %v446, %v504
        %vm525 = vcmp.eq.s32.totalorder %v446, %v507
        %vm526 = vcmp.eq.s32.totalorder %v446, %v510
        %v527 = vsel %vm511, 1, 0
        %v528 = vsel %vm512, 1, 0
        %v529 = vsel %vm513, 1, 0
        %v530 = vsel %vm514, 1, 0
        %v531 = vsel %vm515, 1, 0
        %v532 = vsel %vm516, 1, 0
        %v533 = vsel %vm517, 1, 0
        %v534 = vsel %vm518, 1, 0
        %v535 = vsel %vm519, 1, 0
        %v536 = vsel %vm520, 1, 0
        %v537 = vsel %vm521, 1, 0
        %v538 = vsel %vm522, 1, 0
        %v539 = vsel %vm523, 1, 0
        %v540 = vsel %vm524, 1, 0
        %v541 = vsel %vm525, 1, 0
        %v542 = vsel %vm526, 1, 0
        %v543 = vcvt.s32.f32 %v527
        %v544 = vcvt.s32.f32 %v528
        %v545 = vcvt.s32.f32 %v529
        %v546 = vcvt.s32.f32 %v530
        %v547 = vcvt.s32.f32 %v531
        %v548 = vcvt.s32.f32 %v532
        %v549 = vcvt.s32.f32 %v533
        %v550 = vcvt.s32.f32 %v534
        %v551 = vcvt.s32.f32 %v535
        %v552 = vcvt.s32.f32 %v536
        %v553 = vcvt.s32.f32 %v537
        %v554 = vcvt.s32.f32 %v538
        %v555 = vcvt.s32.f32 %v539
        %v556 = vcvt.s32.f32 %v540
        %v557 = vcvt.s32.f32 %v541
        %v558 = vcvt.s32.f32 %v542
        %v559 = vld [vmem:[%s405] sm:$0xff]
        %v560 = vld [vmem:[%s405 + $0x8] sm:$0xff]
        %v561 = vld [vmem:[%s405 + $0x10] sm:$0xff]
        %v562 = vld [vmem:[%s405 + $0x18] sm:$0xff]
        %v563 = vld [vmem:[%s405 + $0x20] sm:$0xff]
        %v564 = vld [vmem:[%s405 + $0x28] sm:$0xff]
        %v565 = vld [vmem:[%s405 + $0x30] sm:$0xff]
        %v566 = vld [vmem:[%s405 + $0x38] sm:$0xff]
        %v567 = vld [vmem:[%s405 + $0x40] sm:$0xff]
        %v568 = vld [vmem:[%s405 + $0x48] sm:$0xff]
        %v569 = vld [vmem:[%s405 + $0x50] sm:$0xff]
        %v570 = vld [vmem:[%s405 + $0x58] sm:$0xff]
        %v571 = vld [vmem:[%s405 + $0x60] sm:$0xff]
        %v572 = vld [vmem:[%s405 + $0x68] sm:$0xff]
        %v573 = vld [vmem:[%s405 + $0x70] sm:$0xff]
        %v574 = vld [vmem:[%s405 + $0x78] sm:$0xff]
        %575 = vset.pattern.permute.xlu0 0
        %576 = vperm.xlu0 %575, %v559
        %v577 = vpop.permute.xlu0 %576
        %578 = vset.pattern.permute.xlu0 0
        %579 = vperm.xlu0 %578, %v560
        %v580 = vpop.permute.xlu0 %579
        %581 = vset.pattern.permute.xlu0 0
        %582 = vperm.xlu0 %581, %v561
        %v583 = vpop.permute.xlu0 %582
        %584 = vset.pattern.permute.xlu0 0
        %585 = vperm.xlu0 %584, %v562
        %v586 = vpop.permute.xlu0 %585
        %587 = vset.pattern.permute.xlu0 0
        %588 = vperm.xlu0 %587, %v563
        %v589 = vpop.permute.xlu0 %588
        %590 = vset.pattern.permute.xlu0 0
        %591 = vperm.xlu0 %590, %v564
        %v592 = vpop.permute.xlu0 %591
        %593 = vset.pattern.permute.xlu0 0
        %594 = vperm.xlu0 %593, %v565
        %v595 = vpop.permute.xlu0 %594
        %596 = vset.pattern.permute.xlu0 0
        %597 = vperm.xlu0 %596, %v566
        %v598 = vpop.permute.xlu0 %597
        %599 = vset.pattern.permute.xlu0 0
        %600 = vperm.xlu0 %599, %v567
        %v601 = vpop.permute.xlu0 %600
        %602 = vset.pattern.permute.xlu0 0
        %603 = vperm.xlu0 %602, %v568
        %v604 = vpop.permute.xlu0 %603
        %605 = vset.pattern.permute.xlu0 0
        %606 = vperm.xlu0 %605, %v569
        %v607 = vpop.permute.xlu0 %606
        %608 = vset.pattern.permute.xlu0 0
        %609 = vperm.xlu0 %608, %v570
        %v610 = vpop.permute.xlu0 %609
        %611 = vset.pattern.permute.xlu0 0
        %612 = vperm.xlu0 %611, %v571
        %v613 = vpop.permute.xlu0 %612
        %614 = vset.pattern.permute.xlu0 0
        %615 = vperm.xlu0 %614, %v572
        %v616 = vpop.permute.xlu0 %615
        %617 = vset.pattern.permute.xlu0 0
        %618 = vperm.xlu0 %617, %v573
        %v619 = vpop.permute.xlu0 %618
        %620 = vset.pattern.permute.xlu0 0
        %621 = vperm.xlu0 %620, %v574
        %v622 = vpop.permute.xlu0 %621
        %vm623 = vcmp.eq.s32.totalorder %v446, %v577
        %vm624 = vcmp.eq.s32.totalorder %v446, %v580
        %vm625 = vcmp.eq.s32.totalorder %v446, %v583
        %vm626 = vcmp.eq.s32.totalorder %v446, %v586
        %vm627 = vcmp.eq.s32.totalorder %v446, %v589
        %vm628 = vcmp.eq.s32.totalorder %v446, %v592
        %vm629 = vcmp.eq.s32.totalorder %v446, %v595
        %vm630 = vcmp.eq.s32.totalorder %v446, %v598
        %vm631 = vcmp.eq.s32.totalorder %v446, %v601
        %vm632 = vcmp.eq.s32.totalorder %v446, %v604
        %vm633 = vcmp.eq.s32.totalorder %v446, %v607
        %vm634 = vcmp.eq.s32.totalorder %v446, %v610
        %vm635 = vcmp.eq.s32.totalorder %v446, %v613
        %vm636 = vcmp.eq.s32.totalorder %v446, %v616
        %vm637 = vcmp.eq.s32.totalorder %v446, %v619
        %vm638 = vcmp.eq.s32.totalorder %v446, %v622
        %v639 = vsel %vm623, 1, 0
        %v640 = vsel %vm624, 1, 0
        %v641 = vsel %vm625, 1, 0
        %v642 = vsel %vm626, 1, 0
        %v643 = vsel %vm627, 1, 0
        %v644 = vsel %vm628, 1, 0
        %v645 = vsel %vm629, 1, 0
        %v646 = vsel %vm630, 1, 0
        %v647 = vsel %vm631, 1, 0
        %v648 = vsel %vm632, 1, 0
        %v649 = vsel %vm633, 1, 0
        %v650 = vsel %vm634, 1, 0
        %v651 = vsel %vm635, 1, 0
        %v652 = vsel %vm636, 1, 0
        %v653 = vsel %vm637, 1, 0
        %v654 = vsel %vm638, 1, 0
        %v655 = vcvt.s32.f32 %v639
        %v656 = vcvt.s32.f32 %v640
        %v657 = vcvt.s32.f32 %v641
        %v658 = vcvt.s32.f32 %v642
        %v659 = vcvt.s32.f32 %v643
        %v660 = vcvt.s32.f32 %v644
        %v661 = vcvt.s32.f32 %v645
        %v662 = vcvt.s32.f32 %v646
        %v663 = vcvt.s32.f32 %v647
        %v664 = vcvt.s32.f32 %v648
        %v665 = vcvt.s32.f32 %v649
        %v666 = vcvt.s32.f32 %v650
        %v667 = vcvt.s32.f32 %v651
        %v668 = vcvt.s32.f32 %v652
        %v669 = vcvt.s32.f32 %v653
        %v670 = vcvt.s32.f32 %v654
        %vm671 = vcmask 261120
        %v673 = vsel %vm671, %v543, 0
        %v676 = vsel %vm671, %v544, 0
        %v679 = vsel %vm671, %v545, 0
        %v682 = vsel %vm671, %v546, 0
        %v685 = vsel %vm671, %v547, 0
        %v688 = vsel %vm671, %v548, 0
        %v691 = vsel %vm671, %v549, 0
        %v694 = vsel %vm671, %v550, 0
        %v697 = vsel %vm671, %v551, 0
        %v700 = vsel %vm671, %v552, 0
        %v703 = vsel %vm671, %v553, 0
        %v706 = vsel %vm671, %v554, 0
        %v709 = vsel %vm671, %v555, 0
        %v712 = vsel %vm671, %v556, 0
        %v715 = vsel %vm671, %v557, 0
        %v718 = vsel %vm671, %v558, 0
        %720 = vmatprep.subr.mxu0 0.0
        %721 = vmatpush1.msra.mxu0 %v441
        %722 = vmatprep.subr.mxu0 0.0
        %723 = vmatpush1.msra.mxu0 %v442
        %724 = vmatprep.subr.mxu0 0.0
        %725 = vmatpush1.msra.mxu0 %v443
        %726 = vmatprep.subr.mxu0 0.0
        %727 = vmatpush1.msra.mxu0 %v444
        %728 = vmatprep.subr.mxu0 0.0
        %729 = vmatpush1.msra.mxu0 0.0
        %730 = vmatprep.subr.mxu0 0.0
        %731 = vmatpush1.msra.mxu0 0.0
        %732 = vmatprep.subr.mxu0 0.0
        %733 = vmatpush1.msra.mxu0 0.0
        %734 = vmatprep.subr.mxu0 0.0
        %735 = vmatpush1.msra.mxu0 0.0
        %736 = vmatprep.subr.mxu0 0.0
        %737 = vmatpush1.msra.mxu0 0.0
        %738 = vmatprep.subr.mxu0 0.0
        %739 = vmatpush1.msra.mxu0 0.0
        %740 = vmatprep.subr.mxu0 0.0
        %741 = vmatpush1.msra.mxu0 0.0
        %742 = vmatprep.subr.mxu0 0.0
        %743 = vmatpush1.msra.mxu0 0.0
        %744 = vmatprep.subr.mxu0 0.0
        %745 = vmatpush1.msra.mxu0 0.0
        %746 = vmatprep.subr.mxu0 0.0
        %747 = vmatpush1.msra.mxu0 0.0
        %748 = vmatprep.subr.mxu0 0.0
        %749 = vmatpush1.msra.mxu0 0.0
        %750 = vmatprep.subr.mxu0 0.0
        %751 = vmatpush1.msra.mxu0 0.0
        %752 = vmatprep.subr.mxu0 0.0
        %753 = vmatpush1.msra.mxu0 0.0
        %754 = vmatprep.subr.mxu0 0.0
        %755 = vmatpush1.msra.mxu0 0.0
        %756 = vmatprep.subr.mxu0 0.0
        %757 = vmatpush1.msra.mxu0 0.0
        %758 = vmatprep.subr.mxu0 0.0
        %759 = vmatpush1.msra.mxu0 0.0
        %760 = vmatprep.subr.mxu0 0.0
        %761 = vmatpush1.msra.mxu0 0.0
        %762 = vmatprep.subr.mxu0 0.0
        %763 = vmatpush1.msra.mxu0 0.0
        %764 = vmatprep.subr.mxu0 0.0
        %765 = vmatpush1.msra.mxu0 0.0
        %766 = vmatprep.subr.mxu0 0.0
        %767 = vmatpush1.msra.mxu0 0.0
        %768 = vmatprep.subr.mxu0 0.0
        %769 = vmatpush1.msra.mxu0 0.0
        %770 = vmatprep.subr.mxu0 0.0
        %771 = vmatpush1.msra.mxu0 0.0
        %772 = vmatprep.subr.mxu0 0.0
        %773 = vmatpush1.msra.mxu0 0.0
        %774 = vmatprep.subr.mxu0 0.0
        %775 = vmatpush1.msra.mxu0 0.0
        %776 = vmatprep.subr.mxu0 0.0
        %777 = vmatpush1.msra.mxu0 0.0
        %778 = vmatprep.subr.mxu0 0.0
        %779 = vmatpush1.msra.mxu0 0.0
        %780 = vmatprep.subr.mxu0 0.0
        %781 = vmatpush1.msra.mxu0 0.0
        %782 = vmatprep.subr.mxu0 0.0
        %783 = vmatpush1.msra.mxu0 0.0
        %784 = vmatprep.mubr.f32.mxu0 0.0
        %785 = vmatmul.mubr.f32.gmra.mrb[0].mxu0 %v673
        %v786 = vpop.f32.mrb[0].mxu0
        %v787 = vadd.f32 0.0, %v786
        %v788 = vpop.f32.mrb[0].mxu0
        %789 = vmatprep.mubr.f32.mxu0 0.0
        %790 = vmatmul.mubr.f32.gmra.mrb[0].mxu0 %v676
        %v791 = vpop.f32.mrb[0].mxu0
        %v792 = vadd.f32 0.0, %v791
        %v793 = vpop.f32.mrb[0].mxu0
        %794 = vmatprep.mubr.f32.mxu0 0.0
        %795 = vmatmul.mubr.f32.gmra.mrb[0].mxu0 %v679
        %v796 = vpop.f32.mrb[0].mxu0
        %v797 = vadd.f32 0.0, %v796
        %v798 = vpop.f32.mrb[0].mxu0
        %799 = vmatprep.mubr.f32.mxu0 0.0
        %800 = vmatmul.mubr.f32.gmra.mrb[0].mxu0 %v682
        %v801 = vpop.f32.mrb[0].mxu0
        %v802 = vadd.f32 0.0, %v801
        %v803 = vpop.f32.mrb[0].mxu0
        %804 = vmatprep.mubr.f32.mxu0 0.0
        %805 = vmatmul.mubr.f32.gmra.mrb[0].mxu0 %v685
        %v806 = vpop.f32.mrb[0].mxu0
        %v807 = vadd.f32 0.0, %v806
        %v808 = vpop.f32.mrb[0].mxu0
        %809 = vmatprep.mubr.f32.mxu0 0.0
        %810 = vmatmul.mubr.f32.gmra.mrb[0].mxu0 %v688
        %v811 = vpop.f32.mrb[0].mxu0
        %v812 = vadd.f32 0.0, %v811
        %v813 = vpop.f32.mrb[0].mxu0
        %814 = vmatprep.mubr.f32.mxu0 0.0
        %815 = vmatmul.mubr.f32.gmra.mrb[0].mxu0 %v691
        %v816 = vpop.f32.mrb[0].mxu0
        %v817 = vadd.f32 0.0, %v816
        %v818 = vpop.f32.mrb[0].mxu0
        %819 = vmatprep.mubr.f32.mxu0 0.0
        %820 = vmatmul.mubr.f32.gmra.mrb[0].mxu0 %v694
        %v821 = vpop.f32.mrb[0].mxu0
        %v822 = vadd.f32 0.0, %v821
        %v823 = vpop.f32.mrb[0].mxu0
        %824 = vmatprep.mubr.f32.mxu0 0.0
        %825 = vmatmul.mubr.f32.gmra.mrb[0].mxu0 %v697
        %v826 = vpop.f32.mrb[0].mxu0
        %v827 = vadd.f32 0.0, %v826
        %v828 = vpop.f32.mrb[0].mxu0
        %829 = vmatprep.mubr.f32.mxu0 0.0
        %830 = vmatmul.mubr.f32.gmra.mrb[0].mxu0 %v700
        %v831 = vpop.f32.mrb[0].mxu0
        %v832 = vadd.f32 0.0, %v831
        %v833 = vpop.f32.mrb[0].mxu0
        %834 = vmatprep.mubr.f32.mxu0 0.0
        %835 = vmatmul.mubr.f32.gmra.mrb[0].mxu0 %v703
        %v836 = vpop.f32.mrb[0].mxu0
        %v837 = vadd.f32 0.0, %v836
        %v838 = vpop.f32.mrb[0].mxu0
        %839 = vmatprep.mubr.f32.mxu0 0.0
        %840 = vmatmul.mubr.f32.gmra.mrb[0].mxu0 %v706
        %v841 = vpop.f32.mrb[0].mxu0
        %v842 = vadd.f32 0.0, %v841
        %v843 = vpop.f32.mrb[0].mxu0
        %844 = vmatprep.mubr.f32.mxu0 0.0
        %845 = vmatmul.mubr.f32.gmra.mrb[0].mxu0 %v709
        %v846 = vpop.f32.mrb[0].mxu0
        %v847 = vadd.f32 0.0, %v846
        %v848 = vpop.f32.mrb[0].mxu0
        %849 = vmatprep.mubr.f32.mxu0 0.0
        %850 = vmatmul.mubr.f32.gmra.mrb[0].mxu0 %v712
        %v851 = vpop.f32.mrb[0].mxu0
        %v852 = vadd.f32 0.0, %v851
        %v853 = vpop.f32.mrb[0].mxu0
        %854 = vmatprep.mubr.f32.mxu0 0.0
        %855 = vmatmul.mubr.f32.gmra.mrb[0].mxu0 %v715
        %v856 = vpop.f32.mrb[0].mxu0
        %v857 = vadd.f32 0.0, %v856
        %v858 = vpop.f32.mrb[0].mxu0
        %859 = vmatprep.mubr.f32.mxu0 0.0
        %860 = vmatmul.mubr.f32.gmra.mrb[0].mxu0 %v718
        %v861 = vpop.f32.mrb[0].mxu0
        %v862 = vadd.f32 0.0, %v861
        %v863 = vpop.f32.mrb[0].mxu0
        %864 = vdwg.mxu0
        %v866 = vsel %vm671, %v655, 0
        %v869 = vsel %vm671, %v656, 0
        %v872 = vsel %vm671, %v657, 0
        %v875 = vsel %vm671, %v658, 0
        %v878 = vsel %vm671, %v659, 0
        %v881 = vsel %vm671, %v660, 0
        %v884 = vsel %vm671, %v661, 0
        %v887 = vsel %vm671, %v662, 0
        %v890 = vsel %vm671, %v663, 0
        %v893 = vsel %vm671, %v664, 0
        %v896 = vsel %vm671, %v665, 0
        %v899 = vsel %vm671, %v666, 0
        %v902 = vsel %vm671, %v667, 0
        %v905 = vsel %vm671, %v668, 0
        %v908 = vsel %vm671, %v669, 0
        %v911 = vsel %vm671, %v670, 0
        %913 = vmatprep.subr.mxu0 0.0
        %914 = vmatpush1.msra.mxu0 %v441
        %915 = vmatprep.subr.mxu0 0.0
        %916 = vmatpush1.msra.mxu0 %v442
        %917 = vmatprep.subr.mxu0 0.0
        %918 = vmatpush1.msra.mxu0 %v443
        %919 = vmatprep.subr.mxu0 0.0
        %920 = vmatpush1.msra.mxu0 %v444
        %921 = vmatprep.subr.mxu0 0.0
        %922 = vmatpush1.msra.mxu0 0.0
        %923 = vmatprep.subr.mxu0 0.0
        %924 = vmatpush1.msra.mxu0 0.0
        %925 = vmatprep.subr.mxu0 0.0
        %926 = vmatpush1.msra.mxu0 0.0
        %927 = vmatprep.subr.mxu0 0.0
        %928 = vmatpush1.msra.mxu0 0.0
        %929 = vmatprep.subr.mxu0 0.0
        %930 = vmatpush1.msra.mxu0 0.0
        %931 = vmatprep.subr.mxu0 0.0
        %932 = vmatpush1.msra.mxu0 0.0
        %933 = vmatprep.subr.mxu0 0.0
        %934 = vmatpush1.msra.mxu0 0.0
        %935 = vmatprep.subr.mxu0 0.0
        %936 = vmatpush1.msra.mxu0 0.0
        %937 = vmatprep.subr.mxu0 0.0
        %938 = vmatpush1.msra.mxu0 0.0
        %939 = vmatprep.subr.mxu0 0.0
        %940 = vmatpush1.msra.mxu0 0.0
        %941 = vmatprep.subr.mxu0 0.0
        %942 = vmatpush1.msra.mxu0 0.0
        %943 = vmatprep.subr.mxu0 0.0
        %944 = vmatpush1.msra.mxu0 0.0
        %945 = vmatprep.subr.mxu0 0.0
        %946 = vmatpush1.msra.mxu0 0.0
        %947 = vmatprep.subr.mxu0 0.0
        %948 = vmatpush1.msra.mxu0 0.0
        %949 = vmatprep.subr.mxu0 0.0
        %950 = vmatpush1.msra.mxu0 0.0
        %951 = vmatprep.subr.mxu0 0.0
        %952 = vmatpush1.msra.mxu0 0.0
        %953 = vmatprep.subr.mxu0 0.0
        %954 = vmatpush1.msra.mxu0 0.0
        %955 = vmatprep.subr.mxu0 0.0
        %956 = vmatpush1.msra.mxu0 0.0
        %957 = vmatprep.subr.mxu0 0.0
        %958 = vmatpush1.msra.mxu0 0.0
        %959 = vmatprep.subr.mxu0 0.0
        %960 = vmatpush1.msra.mxu0 0.0
        %961 = vmatprep.subr.mxu0 0.0
        %962 = vmatpush1.msra.mxu0 0.0
        %963 = vmatprep.subr.mxu0 0.0
        %964 = vmatpush1.msra.mxu0 0.0
        %965 = vmatprep.subr.mxu0 0.0
        %966 = vmatpush1.msra.mxu0 0.0
        %967 = vmatprep.subr.mxu0 0.0
        %968 = vmatpush1.msra.mxu0 0.0
        %969 = vmatprep.subr.mxu0 0.0
        %970 = vmatpush1.msra.mxu0 0.0
        %971 = vmatprep.subr.mxu0 0.0
        %972 = vmatpush1.msra.mxu0 0.0
        %973 = vmatprep.subr.mxu0 0.0
        %974 = vmatpush1.msra.mxu0 0.0
        %975 = vmatprep.subr.mxu0 0.0
        %976 = vmatpush1.msra.mxu0 0.0
        %977 = vmatprep.mubr.f32.mxu0 0.0
        %978 = vmatmul.mubr.f32.gmra.mrb[0].mxu0 %v866
        %v979 = vpop.f32.mrb[0].mxu0
        %v980 = vadd.f32 0.0, %v979
        %v981 = vpop.f32.mrb[0].mxu0
        %982 = vmatprep.mubr.f32.mxu0 0.0
        %983 = vmatmul.mubr.f32.gmra.mrb[0].mxu0 %v869
        %v984 = vpop.f32.mrb[0].mxu0
        %v985 = vadd.f32 0.0, %v984
        %v986 = vpop.f32.mrb[0].mxu0
        %987 = vmatprep.mubr.f32.mxu0 0.0
        %988 = vmatmul.mubr.f32.gmra.mrb[0].mxu0 %v872
        %v989 = vpop.f32.mrb[0].mxu0
        %v990 = vadd.f32 0.0, %v989
        %v991 = vpop.f32.mrb[0].mxu0
        %992 = vmatprep.mubr.f32.mxu0 0.0
        %993 = vmatmul.mubr.f32.gmra.mrb[0].mxu0 %v875
        %v994 = vpop.f32.mrb[0].mxu0
        %v995 = vadd.f32 0.0, %v994
        %v996 = vpop.f32.mrb[0].mxu0
        %997 = vmatprep.mubr.f32.mxu0 0.0
        %998 = vmatmul.mubr.f32.gmra.mrb[0].mxu0 %v878
        %v999 = vpop.f32.mrb[0].mxu0
        %v1000 = vadd.f32 0.0, %v999
        %v1001 = vpop.f32.mrb[0].mxu0
        %1002 = vmatprep.mubr.f32.mxu0 0.0
        %1003 = vmatmul.mubr.f32.gmra.mrb[0].mxu0 %v881
        %v1004 = vpop.f32.mrb[0].mxu0
        %v1005 = vadd.f32 0.0, %v1004
        %v1006 = vpop.f32.mrb[0].mxu0
        %1007 = vmatprep.mubr.f32.mxu0 0.0
        %1008 = vmatmul.mubr.f32.gmra.mrb[0].mxu0 %v884
        %v1009 = vpop.f32.mrb[0].mxu0
        %v1010 = vadd.f32 0.0, %v1009
        %v1011 = vpop.f32.mrb[0].mxu0
        %1012 = vmatprep.mubr.f32.mxu0 0.0
        %1013 = vmatmul.mubr.f32.gmra.mrb[0].mxu0 %v887
        %v1014 = vpop.f32.mrb[0].mxu0
        %v1015 = vadd.f32 0.0, %v1014
        %v1016 = vpop.f32.mrb[0].mxu0
        %1017 = vmatprep.mubr.f32.mxu0 0.0
        %1018 = vmatmul.mubr.f32.gmra.mrb[0].mxu0 %v890
        %v1019 = vpop.f32.mrb[0].mxu0
        %v1020 = vadd.f32 0.0, %v1019
        %v1021 = vpop.f32.mrb[0].mxu0
        %1022 = vmatprep.mubr.f32.mxu0 0.0
        %1023 = vmatmul.mubr.f32.gmra.mrb[0].mxu0 %v893
        %v1024 = vpop.f32.mrb[0].mxu0
        %v1025 = vadd.f32 0.0, %v1024
        %v1026 = vpop.f32.mrb[0].mxu0
        %1027 = vmatprep.mubr.f32.mxu0 0.0
        %1028 = vmatmul.mubr.f32.gmra.mrb[0].mxu0 %v896
        %v1029 = vpop.f32.mrb[0].mxu0
        %v1030 = vadd.f32 0.0, %v1029
        %v1031 = vpop.f32.mrb[0].mxu0
        %1032 = vmatprep.mubr.f32.mxu0 0.0
        %1033 = vmatmul.mubr.f32.gmra.mrb[0].mxu0 %v899
        %v1034 = vpop.f32.mrb[0].mxu0
        %v1035 = vadd.f32 0.0, %v1034
        %v1036 = vpop.f32.mrb[0].mxu0
        %1037 = vmatprep.mubr.f32.mxu0 0.0
        %1038 = vmatmul.mubr.f32.gmra.mrb[0].mxu0 %v902
        %v1039 = vpop.f32.mrb[0].mxu0
        %v1040 = vadd.f32 0.0, %v1039
        %v1041 = vpop.f32.mrb[0].mxu0
        %1042 = vmatprep.mubr.f32.mxu0 0.0
        %1043 = vmatmul.mubr.f32.gmra.mrb[0].mxu0 %v905
        %v1044 = vpop.f32.mrb[0].mxu0
        %v1045 = vadd.f32 0.0, %v1044
        %v1046 = vpop.f32.mrb[0].mxu0
        %1047 = vmatprep.mubr.f32.mxu0 0.0
        %1048 = vmatmul.mubr.f32.gmra.mrb[0].mxu0 %v908
        %v1049 = vpop.f32.mrb[0].mxu0
        %v1050 = vadd.f32 0.0, %v1049
        %v1051 = vpop.f32.mrb[0].mxu0
        %1052 = vmatprep.mubr.f32.mxu0 0.0
        %1053 = vmatmul.mubr.f32.gmra.mrb[0].mxu0 %v911
        %v1054 = vpop.f32.mrb[0].mxu0
        %v1055 = vadd.f32 0.0, %v1054
        %v1056 = vpop.f32.mrb[0].mxu0
        %1057 = vdwg.mxu0
        %v1058 = vld [vmem:[%s420] sm:$0xff]
        %v1059 = vld [vmem:[%s420 + $0x8] sm:$0xff]
        %v1060 = vld [vmem:[%s420 + $0x10] sm:$0xff]
        %v1061 = vld [vmem:[%s420 + $0x18] sm:$0xff]
        %v1062 = vld [vmem:[%s420 + $0x20] sm:$0xff]
        %v1063 = vld [vmem:[%s420 + $0x28] sm:$0xff]
        %v1064 = vld [vmem:[%s420 + $0x30] sm:$0xff]
        %v1065 = vld [vmem:[%s420 + $0x38] sm:$0xff]
        %v1066 = vld [vmem:[%s420 + $0x40] sm:$0xff]
        %v1067 = vld [vmem:[%s420 + $0x48] sm:$0xff]
        %v1068 = vld [vmem:[%s420 + $0x50] sm:$0xff]
        %v1069 = vld [vmem:[%s420 + $0x58] sm:$0xff]
        %v1070 = vld [vmem:[%s420 + $0x60] sm:$0xff]
        %v1071 = vld [vmem:[%s420 + $0x68] sm:$0xff]
        %v1072 = vld [vmem:[%s420 + $0x70] sm:$0xff]
        %v1073 = vld [vmem:[%s420 + $0x78] sm:$0xff]
        %v1074 = vld [vmem:[%s6] sm:$0xff]
        %v1075 = vld [vmem:[%s6 + $0x8] sm:$0xff]
        %v1076 = vld [vmem:[%s6 + $0x10] sm:$0xff]
        %v1077 = vld [vmem:[%s6 + $0x18] sm:$0xff]
        %v1078 = vld [vmem:[%s6 + $0x20] sm:$0xff]
        %v1079 = vld [vmem:[%s6 + $0x28] sm:$0xff]
        %v1080 = vld [vmem:[%s6 + $0x30] sm:$0xff]
        %v1081 = vld [vmem:[%s6 + $0x38] sm:$0xff]
        %v1082 = vld [vmem:[%s6 + $0x40] sm:$0xff]
        %v1083 = vld [vmem:[%s6 + $0x48] sm:$0xff]
        %v1084 = vld [vmem:[%s6 + $0x50] sm:$0xff]
        %v1085 = vld [vmem:[%s6 + $0x58] sm:$0xff]
        %v1086 = vld [vmem:[%s6 + $0x60] sm:$0xff]
        %v1087 = vld [vmem:[%s6 + $0x68] sm:$0xff]
        %v1088 = vld [vmem:[%s6 + $0x70] sm:$0xff]
        %v1089 = vld [vmem:[%s6 + $0x78] sm:$0xff]
        %vm1090 = vcmask 523264
        %v1092 = vsel %vm1090, %v980, 0
        %v1095 = vsel %vm1090, %v985, 0
        %v1098 = vsel %vm1090, %v990, 0
        %v1101 = vsel %vm1090, %v995, 0
        %v1104 = vsel %vm1090, %v1000, 0
        %v1107 = vsel %vm1090, %v1005, 0
        %v1110 = vsel %vm1090, %v1010, 0
        %v1113 = vsel %vm1090, %v1015, 0
        %v1116 = vsel %vm1090, %v1020, 0
        %v1119 = vsel %vm1090, %v1025, 0
        %v1122 = vsel %vm1090, %v1030, 0
        %v1125 = vsel %vm1090, %v1035, 0
        %v1128 = vsel %vm1090, %v1040, 0
        %v1131 = vsel %vm1090, %v1045, 0
        %v1134 = vsel %vm1090, %v1050, 0
        %v1137 = vsel %vm1090, %v1055, 0
        %1139 = vmatprep.subr.mxu0 0.0
        %1140 = vmatpush1.msra.mxu0 %v1082
        %1141 = vmatprep.subr.mxu0 0.0
        %1142 = vmatpush1.msra.mxu0 %v1083
        %1143 = vmatprep.subr.mxu0 0.0
        %1144 = vmatpush1.msra.mxu0 %v1084
        %1145 = vmatprep.subr.mxu0 0.0
        %1146 = vmatpush1.msra.mxu0 %v1085
        %1147 = vmatprep.subr.mxu0 0.0
        %1148 = vmatpush1.msra.mxu0 %v1086
        %1149 = vmatprep.subr.mxu0 0.0
        %1150 = vmatpush1.msra.mxu0 %v1087
        %1151 = vmatprep.subr.mxu0 0.0
        %1152 = vmatpush1.msra.mxu0 %v1088
        %1153 = vmatprep.subr.mxu0 0.0
        %1154 = vmatpush1.msra.mxu0 %v1089
        %1155 = vmatprep.subr.mxu0 0.0
        %1156 = vmatpush1.msra.mxu0 0.0
        %1157 = vmatprep.subr.mxu0 0.0
        %1158 = vmatpush1.msra.mxu0 0.0
        %1159 = vmatprep.subr.mxu0 0.0
        %1160 = vmatpush1.msra.mxu0 0.0
        %1161 = vmatprep.subr.mxu0 0.0
        %1162 = vmatpush1.msra.mxu0 0.0
        %1163 = vmatprep.subr.mxu0 0.0
        %1164 = vmatpush1.msra.mxu0 0.0
        %1165 = vmatprep.subr.mxu0 0.0
        %1166 = vmatpush1.msra.mxu0 0.0
        %1167 = vmatprep.subr.mxu0 0.0
        %1168 = vmatpush1.msra.mxu0 0.0
        %1169 = vmatprep.subr.mxu0 0.0
        %1170 = vmatpush1.msra.mxu0 0.0
        %1171 = vmatprep.subr.mxu0 0.0
        %1172 = vmatpush1.msra.mxu0 0.0
        %1173 = vmatprep.subr.mxu0 0.0
        %1174 = vmatpush1.msra.mxu0 0.0
        %1175 = vmatprep.subr.mxu0 0.0
        %1176 = vmatpush1.msra.mxu0 0.0
        %1177 = vmatprep.subr.mxu0 0.0
        %1178 = vmatpush1.msra.mxu0 0.0
        %1179 = vmatprep.subr.mxu0 0.0
        %1180 = vmatpush1.msra.mxu0 0.0
        %1181 = vmatprep.subr.mxu0 0.0
        %1182 = vmatpush1.msra.mxu0 0.0
        %1183 = vmatprep.subr.mxu0 0.0
        %1184 = vmatpush1.msra.mxu0 0.0
        %1185 = vmatprep.subr.mxu0 0.0
        %1186 = vmatpush1.msra.mxu0 0.0
        %1187 = vmatprep.subr.mxu0 0.0
        %1188 = vmatpush1.msra.mxu0 0.0
        %1189 = vmatprep.subr.mxu0 0.0
        %1190 = vmatpush1.msra.mxu0 0.0
        %1191 = vmatprep.subr.mxu0 0.0
        %1192 = vmatpush1.msra.mxu0 0.0
        %1193 = vmatprep.subr.mxu0 0.0
        %1194 = vmatpush1.msra.mxu0 0.0
        %1195 = vmatprep.subr.mxu0 0.0
        %1196 = vmatpush1.msra.mxu0 0.0
        %1197 = vmatprep.subr.mxu0 0.0
        %1198 = vmatpush1.msra.mxu0 0.0
        %1199 = vmatprep.subr.mxu0 0.0
        %1200 = vmatpush1.msra.mxu0 0.0
        %1201 = vmatprep.subr.mxu0 0.0
        %1202 = vmatpush1.msra.mxu0 0.0
        %1203 = vmatprep.mubr.f32.mxu0 0.0
        %1204 = vmatmul.mubr.f32.gmra.mrb[0].mxu0 %v1092
        %v1205 = vpop.f32.mrb[0].mxu0
        %v1206 = vadd.f32 0.0, %v1205
        %v1207 = vpop.f32.mrb[0].mxu0
        %1208 = vmatprep.mubr.f32.mxu0 0.0
        %1209 = vmatmul.mubr.f32.gmra.mrb[0].mxu0 %v1095
        %v1210 = vpop.f32.mrb[0].mxu0
        %v1211 = vadd.f32 0.0, %v1210
        %v1212 = vpop.f32.mrb[0].mxu0
        %1213 = vmatprep.mubr.f32.mxu0 0.0
        %1214 = vmatmul.mubr.f32.gmra.mrb[0].mxu0 %v1098
        %v1215 = vpop.f32.mrb[0].mxu0
        %v1216 = vadd.f32 0.0, %v1215
        %v1217 = vpop.f32.mrb[0].mxu0
        %1218 = vmatprep.mubr.f32.mxu0 0.0
        %1219 = vmatmul.mubr.f32.gmra.mrb[0].mxu0 %v1101
        %v1220 = vpop.f32.mrb[0].mxu0
        %v1221 = vadd.f32 0.0, %v1220
        %v1222 = vpop.f32.mrb[0].mxu0
        %1223 = vmatprep.mubr.f32.mxu0 0.0
        %1224 = vmatmul.mubr.f32.gmra.mrb[0].mxu0 %v1104
        %v1225 = vpop.f32.mrb[0].mxu0
        %v1226 = vadd.f32 0.0, %v1225
        %v1227 = vpop.f32.mrb[0].mxu0
        %1228 = vmatprep.mubr.f32.mxu0 0.0
        %1229 = vmatmul.mubr.f32.gmra.mrb[0].mxu0 %v1107
        %v1230 = vpop.f32.mrb[0].mxu0
        %v1231 = vadd.f32 0.0, %v1230
        %v1232 = vpop.f32.mrb[0].mxu0
        %1233 = vmatprep.mubr.f32.mxu0 0.0
        %1234 = vmatmul.mubr.f32.gmra.mrb[0].mxu0 %v1110
        %v1235 = vpop.f32.mrb[0].mxu0
        %v1236 = vadd.f32 0.0, %v1235
        %v1237 = vpop.f32.mrb[0].mxu0
        %1238 = vmatprep.mubr.f32.mxu0 0.0
        %1239 = vmatmul.mubr.f32.gmra.mrb[0].mxu0 %v1113
        %v1240 = vpop.f32.mrb[0].mxu0
        %v1241 = vadd.f32 0.0, %v1240
        %v1242 = vpop.f32.mrb[0].mxu0
        %1243 = vmatprep.mubr.f32.mxu0 0.0
        %1244 = vmatmul.mubr.f32.gmra.mrb[0].mxu0 %v1116
        %v1245 = vpop.f32.mrb[0].mxu0
        %v1246 = vadd.f32 0.0, %v1245
        %v1247 = vpop.f32.mrb[0].mxu0
        %1248 = vmatprep.mubr.f32.mxu0 0.0
        %1249 = vmatmul.mubr.f32.gmra.mrb[0].mxu0 %v1119
        %v1250 = vpop.f32.mrb[0].mxu0
        %v1251 = vadd.f32 0.0, %v1250
        %v1252 = vpop.f32.mrb[0].mxu0
        %1253 = vmatprep.mubr.f32.mxu0 0.0
        %1254 = vmatmul.mubr.f32.gmra.mrb[0].mxu0 %v1122
        %v1255 = vpop.f32.mrb[0].mxu0
        %v1256 = vadd.f32 0.0, %v1255
        %v1257 = vpop.f32.mrb[0].mxu0
        %1258 = vmatprep.mubr.f32.mxu0 0.0
        %1259 = vmatmul.mubr.f32.gmra.mrb[0].mxu0 %v1125
        %v1260 = vpop.f32.mrb[0].mxu0
        %v1261 = vadd.f32 0.0, %v1260
        %v1262 = vpop.f32.mrb[0].mxu0
        %1263 = vmatprep.mubr.f32.mxu0 0.0
        %1264 = vmatmul.mubr.f32.gmra.mrb[0].mxu0 %v1128
        %v1265 = vpop.f32.mrb[0].mxu0
        %v1266 = vadd.f32 0.0, %v1265
        %v1267 = vpop.f32.mrb[0].mxu0
        %1268 = vmatprep.mubr.f32.mxu0 0.0
        %1269 = vmatmul.mubr.f32.gmra.mrb[0].mxu0 %v1131
        %v1270 = vpop.f32.mrb[0].mxu0
        %v1271 = vadd.f32 0.0, %v1270
        %v1272 = vpop.f32.mrb[0].mxu0
        %1273 = vmatprep.mubr.f32.mxu0 0.0
        %1274 = vmatmul.mubr.f32.gmra.mrb[0].mxu0 %v1134
        %v1275 = vpop.f32.mrb[0].mxu0
        %v1276 = vadd.f32 0.0, %v1275
        %v1277 = vpop.f32.mrb[0].mxu0
        %1278 = vmatprep.mubr.f32.mxu0 0.0
        %1279 = vmatmul.mubr.f32.gmra.mrb[0].mxu0 %v1137
        %v1280 = vpop.f32.mrb[0].mxu0
        %v1281 = vadd.f32 0.0, %v1280
        %v1282 = vpop.f32.mrb[0].mxu0
        %1283 = vdwg.mxu0
        %v1285 = vsel %vm1090, %v787, 0
        %v1288 = vsel %vm1090, %v792, 0
        %v1291 = vsel %vm1090, %v797, 0
        %v1294 = vsel %vm1090, %v802, 0
        %v1297 = vsel %vm1090, %v807, 0
        %v1300 = vsel %vm1090, %v812, 0
        %v1303 = vsel %vm1090, %v817, 0
        %v1306 = vsel %vm1090, %v822, 0
        %v1309 = vsel %vm1090, %v827, 0
        %v1312 = vsel %vm1090, %v832, 0
        %v1315 = vsel %vm1090, %v837, 0
        %v1318 = vsel %vm1090, %v842, 0
        %v1321 = vsel %vm1090, %v847, 0
        %v1324 = vsel %vm1090, %v852, 0
        %v1327 = vsel %vm1090, %v857, 0
        %v1330 = vsel %vm1090, %v862, 0
        %1332 = vmatprep.subr.mxu0 0.0
        %1333 = vmatpush1.msra.mxu0 %v1074
        %1334 = vmatprep.subr.mxu0 0.0
        %1335 = vmatpush1.msra.mxu0 %v1075
        %1336 = vmatprep.subr.mxu0 0.0
        %1337 = vmatpush1.msra.mxu0 %v1076
        %1338 = vmatprep.subr.mxu0 0.0
        %1339 = vmatpush1.msra.mxu0 %v1077
        %1340 = vmatprep.subr.mxu0 0.0
        %1341 = vmatpush1.msra.mxu0 %v1078
        %1342 = vmatprep.subr.mxu0 0.0
        %1343 = vmatpush1.msra.mxu0 %v1079
        %1344 = vmatprep.subr.mxu0 0.0
        %1345 = vmatpush1.msra.mxu0 %v1080
        %1346 = vmatprep.subr.mxu0 0.0
        %1347 = vmatpush1.msra.mxu0 %v1081
        %1348 = vmatprep.subr.mxu0 0.0
        %1349 = vmatpush1.msra.mxu0 0.0
        %1350 = vmatprep.subr.mxu0 0.0
        %1351 = vmatpush1.msra.mxu0 0.0
        %1352 = vmatprep.subr.mxu0 0.0
        %1353 = vmatpush1.msra.mxu0 0.0
        %1354 = vmatprep.subr.mxu0 0.0
        %1355 = vmatpush1.msra.mxu0 0.0
        %1356 = vmatprep.subr.mxu0 0.0
        %1357 = vmatpush1.msra.mxu0 0.0
        %1358 = vmatprep.subr.mxu0 0.0
        %1359 = vmatpush1.msra.mxu0 0.0
        %1360 = vmatprep.subr.mxu0 0.0
        %1361 = vmatpush1.msra.mxu0 0.0
        %1362 = vmatprep.subr.mxu0 0.0
        %1363 = vmatpush1.msra.mxu0 0.0
        %1364 = vmatprep.subr.mxu0 0.0
        %1365 = vmatpush1.msra.mxu0 0.0
        %1366 = vmatprep.subr.mxu0 0.0
        %1367 = vmatpush1.msra.mxu0 0.0
        %1368 = vmatprep.subr.mxu0 0.0
        %1369 = vmatpush1.msra.mxu0 0.0
        %1370 = vmatprep.subr.mxu0 0.0
        %1371 = vmatpush1.msra.mxu0 0.0
        %1372 = vmatprep.subr.mxu0 0.0
        %1373 = vmatpush1.msra.mxu0 0.0
        %1374 = vmatprep.subr.mxu0 0.0
        %1375 = vmatpush1.msra.mxu0 0.0
        %1376 = vmatprep.subr.mxu0 0.0
        %1377 = vmatpush1.msra.mxu0 0.0
        %1378 = vmatprep.subr.mxu0 0.0
        %1379 = vmatpush1.msra.mxu0 0.0
        %1380 = vmatprep.subr.mxu0 0.0
        %1381 = vmatpush1.msra.mxu0 0.0
        %1382 = vmatprep.subr.mxu0 0.0
        %1383 = vmatpush1.msra.mxu0 0.0
        %1384 = vmatprep.subr.mxu0 0.0
        %1385 = vmatpush1.msra.mxu0 0.0
        %1386 = vmatprep.subr.mxu0 0.0
        %1387 = vmatpush1.msra.mxu0 0.0
        %1388 = vmatprep.subr.mxu0 0.0
        %1389 = vmatpush1.msra.mxu0 0.0
        %1390 = vmatprep.subr.mxu0 0.0
        %1391 = vmatpush1.msra.mxu0 0.0
        %1392 = vmatprep.subr.mxu0 0.0
        %1393 = vmatpush1.msra.mxu0 0.0
        %1394 = vmatprep.subr.mxu0 0.0
        %1395 = vmatpush1.msra.mxu0 0.0
        %1396 = vmatprep.mubr.f32.mxu0 0.0
        %1397 = vmatmul.mubr.f32.gmra.mrb[0].mxu0 %v1285
        %v1398 = vpop.f32.mrb[0].mxu0
        %v1399 = vadd.f32 %v1206, %v1398
        %v1400 = vpop.f32.mrb[0].mxu0
        %1401 = vmatprep.mubr.f32.mxu0 0.0
        %1402 = vmatmul.mubr.f32.gmra.mrb[0].mxu0 %v1288
        %v1403 = vpop.f32.mrb[0].mxu0
        %v1404 = vadd.f32 %v1211, %v1403
        %v1405 = vpop.f32.mrb[0].mxu0
        %1406 = vmatprep.mubr.f32.mxu0 0.0
        %1407 = vmatmul.mubr.f32.gmra.mrb[0].mxu0 %v1291
        %v1408 = vpop.f32.mrb[0].mxu0
        %v1409 = vadd.f32 %v1216, %v1408
        %v1410 = vpop.f32.mrb[0].mxu0
        %1411 = vmatprep.mubr.f32.mxu0 0.0
        %1412 = vmatmul.mubr.f32.gmra.mrb[0].mxu0 %v1294
        %v1413 = vpop.f32.mrb[0].mxu0
        %v1414 = vadd.f32 %v1221, %v1413
        %v1415 = vpop.f32.mrb[0].mxu0
        %1416 = vmatprep.mubr.f32.mxu0 0.0
        %1417 = vmatmul.mubr.f32.gmra.mrb[0].mxu0 %v1297
        %v1418 = vpop.f32.mrb[0].mxu0
        %v1419 = vadd.f32 %v1226, %v1418
        %v1420 = vpop.f32.mrb[0].mxu0
        %1421 = vmatprep.mubr.f32.mxu0 0.0
        %1422 = vmatmul.mubr.f32.gmra.mrb[0].mxu0 %v1300
        %v1423 = vpop.f32.mrb[0].mxu0
        %v1424 = vadd.f32 %v1231, %v1423
        %v1425 = vpop.f32.mrb[0].mxu0
        %1426 = vmatprep.mubr.f32.mxu0 0.0
        %1427 = vmatmul.mubr.f32.gmra.mrb[0].mxu0 %v1303
        %v1428 = vpop.f32.mrb[0].mxu0
        %v1429 = vadd.f32 %v1236, %v1428
        %v1430 = vpop.f32.mrb[0].mxu0
        %1431 = vmatprep.mubr.f32.mxu0 0.0
        %1432 = vmatmul.mubr.f32.gmra.mrb[0].mxu0 %v1306
        %v1433 = vpop.f32.mrb[0].mxu0
        %v1434 = vadd.f32 %v1241, %v1433
        %v1435 = vpop.f32.mrb[0].mxu0
        %1436 = vmatprep.mubr.f32.mxu0 0.0
        %1437 = vmatmul.mubr.f32.gmra.mrb[0].mxu0 %v1309
        %v1438 = vpop.f32.mrb[0].mxu0
        %v1439 = vadd.f32 %v1246, %v1438
        %v1440 = vpop.f32.mrb[0].mxu0
        %1441 = vmatprep.mubr.f32.mxu0 0.0
        %1442 = vmatmul.mubr.f32.gmra.mrb[0].mxu0 %v1312
        %v1443 = vpop.f32.mrb[0].mxu0
        %v1444 = vadd.f32 %v1251, %v1443
        %v1445 = vpop.f32.mrb[0].mxu0
        %1446 = vmatprep.mubr.f32.mxu0 0.0
        %1447 = vmatmul.mubr.f32.gmra.mrb[0].mxu0 %v1315
        %v1448 = vpop.f32.mrb[0].mxu0
        %v1449 = vadd.f32 %v1256, %v1448
        %v1450 = vpop.f32.mrb[0].mxu0
        %1451 = vmatprep.mubr.f32.mxu0 0.0
        %1452 = vmatmul.mubr.f32.gmra.mrb[0].mxu0 %v1318
        %v1453 = vpop.f32.mrb[0].mxu0
        %v1454 = vadd.f32 %v1261, %v1453
        %v1455 = vpop.f32.mrb[0].mxu0
        %1456 = vmatprep.mubr.f32.mxu0 0.0
        %1457 = vmatmul.mubr.f32.gmra.mrb[0].mxu0 %v1321
        %v1458 = vpop.f32.mrb[0].mxu0
        %v1459 = vadd.f32 %v1266, %v1458
        %v1460 = vpop.f32.mrb[0].mxu0
        %1461 = vmatprep.mubr.f32.mxu0 0.0
        %1462 = vmatmul.mubr.f32.gmra.mrb[0].mxu0 %v1324
        %v1463 = vpop.f32.mrb[0].mxu0
        %v1464 = vadd.f32 %v1271, %v1463
        %v1465 = vpop.f32.mrb[0].mxu0
        %1466 = vmatprep.mubr.f32.mxu0 0.0
        %1467 = vmatmul.mubr.f32.gmra.mrb[0].mxu0 %v1327
        %v1468 = vpop.f32.mrb[0].mxu0
        %v1469 = vadd.f32 %v1276, %v1468
        %v1470 = vpop.f32.mrb[0].mxu0
        %1471 = vmatprep.mubr.f32.mxu0 0.0
        %1472 = vmatmul.mubr.f32.gmra.mrb[0].mxu0 %v1330
        %v1473 = vpop.f32.mrb[0].mxu0
        %v1474 = vadd.f32 %v1281, %v1473
        %v1475 = vpop.f32.mrb[0].mxu0
        %1476 = vdwg.mxu0
        %v1477 = vld [vmem:[%s6 + $0x80] sm:$0xff]
        %v1478 = vld [vmem:[%s6 + $0x88] sm:$0xff]
        %v1479 = vld [vmem:[%s6 + $0x90] sm:$0xff]
        %v1480 = vld [vmem:[%s6 + $0x98] sm:$0xff]
        %v1482 = vsel %vm671, %v1058, 0
        %v1485 = vsel %vm671, %v1059, 0
        %v1488 = vsel %vm671, %v1060, 0
        %v1491 = vsel %vm671, %v1061, 0
        %v1494 = vsel %vm671, %v1062, 0
        %v1497 = vsel %vm671, %v1063, 0
        %v1500 = vsel %vm671, %v1064, 0
        %v1503 = vsel %vm671, %v1065, 0
        %v1506 = vsel %vm671, %v1066, 0
        %v1509 = vsel %vm671, %v1067, 0
        %v1512 = vsel %vm671, %v1068, 0
        %v1515 = vsel %vm671, %v1069, 0
        %v1518 = vsel %vm671, %v1070, 0
        %v1521 = vsel %vm671, %v1071, 0
        %v1524 = vsel %vm671, %v1072, 0
        %v1527 = vsel %vm671, %v1073, 0
        %1529 = vmatprep.subr.mxu0 0.0
        %1530 = vmatpush1.msra.mxu0 %v1477
        %1531 = vmatprep.subr.mxu0 0.0
        %1532 = vmatpush1.msra.mxu0 %v1478
        %1533 = vmatprep.subr.mxu0 0.0
        %1534 = vmatpush1.msra.mxu0 %v1479
        %1535 = vmatprep.subr.mxu0 0.0
        %1536 = vmatpush1.msra.mxu0 %v1480
        %1537 = vmatprep.subr.mxu0 0.0
        %1538 = vmatpush1.msra.mxu0 0.0
        %1539 = vmatprep.subr.mxu0 0.0
        %1540 = vmatpush1.msra.mxu0 0.0
        %1541 = vmatprep.subr.mxu0 0.0
        %1542 = vmatpush1.msra.mxu0 0.0
        %1543 = vmatprep.subr.mxu0 0.0
        %1544 = vmatpush1.msra.mxu0 0.0
        %1545 = vmatprep.subr.mxu0 0.0
        %1546 = vmatpush1.msra.mxu0 0.0
        %1547 = vmatprep.subr.mxu0 0.0
        %1548 = vmatpush1.msra.mxu0 0.0
        %1549 = vmatprep.subr.mxu0 0.0
        %1550 = vmatpush1.msra.mxu0 0.0
        %1551 = vmatprep.subr.mxu0 0.0
        %1552 = vmatpush1.msra.mxu0 0.0
        %1553 = vmatprep.subr.mxu0 0.0
        %1554 = vmatpush1.msra.mxu0 0.0
        %1555 = vmatprep.subr.mxu0 0.0
        %1556 = vmatpush1.msra.mxu0 0.0
        %1557 = vmatprep.subr.mxu0 0.0
        %1558 = vmatpush1.msra.mxu0 0.0
        %1559 = vmatprep.subr.mxu0 0.0
        %1560 = vmatpush1.msra.mxu0 0.0
        %1561 = vmatprep.subr.mxu0 0.0
        %1562 = vmatpush1.msra.mxu0 0.0
        %1563 = vmatprep.subr.mxu0 0.0
        %1564 = vmatpush1.msra.mxu0 0.0
        %1565 = vmatprep.subr.mxu0 0.0
        %1566 = vmatpush1.msra.mxu0 0.0
        %1567 = vmatprep.subr.mxu0 0.0
        %1568 = vmatpush1.msra.mxu0 0.0
        %1569 = vmatprep.subr.mxu0 0.0
        %1570 = vmatpush1.msra.mxu0 0.0
        %1571 = vmatprep.subr.mxu0 0.0
        %1572 = vmatpush1.msra.mxu0 0.0
        %1573 = vmatprep.subr.mxu0 0.0
        %1574 = vmatpush1.msra.mxu0 0.0
        %1575 = vmatprep.subr.mxu0 0.0
        %1576 = vmatpush1.msra.mxu0 0.0
        %1577 = vmatprep.subr.mxu0 0.0
        %1578 = vmatpush1.msra.mxu0 0.0
        %1579 = vmatprep.subr.mxu0 0.0
        %1580 = vmatpush1.msra.mxu0 0.0
        %1581 = vmatprep.subr.mxu0 0.0
        %1582 = vmatpush1.msra.mxu0 0.0
        %1583 = vmatprep.subr.mxu0 0.0
        %1584 = vmatpush1.msra.mxu0 0.0
        %1585 = vmatprep.subr.mxu0 0.0
        %1586 = vmatpush1.msra.mxu0 0.0
        %1587 = vmatprep.subr.mxu0 0.0
        %1588 = vmatpush1.msra.mxu0 0.0
        %1589 = vmatprep.subr.mxu0 0.0
        %1590 = vmatpush1.msra.mxu0 0.0
        %1591 = vmatprep.subr.mxu0 0.0
        %1592 = vmatpush1.msra.mxu0 0.0
        %1593 = vmatprep.mubr.f32.mxu0 0.0
        %1594 = vmatmul.mubr.f32.gmra.mrb[0].mxu0 %v1482
        %v1595 = vpop.f32.mrb[0].mxu0
        %v1596 = vadd.f32 0.0, %v1595
        %v1597 = vpop.f32.mrb[0].mxu0
        %1598 = vmatprep.mubr.f32.mxu0 0.0
        %1599 = vmatmul.mubr.f32.gmra.mrb[0].mxu0 %v1485
        %v1600 = vpop.f32.mrb[0].mxu0
        %v1601 = vadd.f32 0.0, %v1600
        %v1602 = vpop.f32.mrb[0].mxu0
        %1603 = vmatprep.mubr.f32.mxu0 0.0
        %1604 = vmatmul.mubr.f32.gmra.mrb[0].mxu0 %v1488
        %v1605 = vpop.f32.mrb[0].mxu0
        %v1606 = vadd.f32 0.0, %v1605
        %v1607 = vpop.f32.mrb[0].mxu0
        %1608 = vmatprep.mubr.f32.mxu0 0.0
        %1609 = vmatmul.mubr.f32.gmra.mrb[0].mxu0 %v1491
        %v1610 = vpop.f32.mrb[0].mxu0
        %v1611 = vadd.f32 0.0, %v1610
        %v1612 = vpop.f32.mrb[0].mxu0
        %1613 = vmatprep.mubr.f32.mxu0 0.0
        %1614 = vmatmul.mubr.f32.gmra.mrb[0].mxu0 %v1494
        %v1615 = vpop.f32.mrb[0].mxu0
        %v1616 = vadd.f32 0.0, %v1615
        %v1617 = vpop.f32.mrb[0].mxu0
        %1618 = vmatprep.mubr.f32.mxu0 0.0
        %1619 = vmatmul.mubr.f32.gmra.mrb[0].mxu0 %v1497
        %v1620 = vpop.f32.mrb[0].mxu0
        %v1621 = vadd.f32 0.0, %v1620
        %v1622 = vpop.f32.mrb[0].mxu0
        %1623 = vmatprep.mubr.f32.mxu0 0.0
        %1624 = vmatmul.mubr.f32.gmra.mrb[0].mxu0 %v1500
        %v1625 = vpop.f32.mrb[0].mxu0
        %v1626 = vadd.f32 0.0, %v1625
        %v1627 = vpop.f32.mrb[0].mxu0
        %1628 = vmatprep.mubr.f32.mxu0 0.0
        %1629 = vmatmul.mubr.f32.gmra.mrb[0].mxu0 %v1503
        %v1630 = vpop.f32.mrb[0].mxu0
        %v1631 = vadd.f32 0.0, %v1630
        %v1632 = vpop.f32.mrb[0].mxu0
        %1633 = vmatprep.mubr.f32.mxu0 0.0
        %1634 = vmatmul.mubr.f32.gmra.mrb[0].mxu0 %v1506
        %v1635 = vpop.f32.mrb[0].mxu0
        %v1636 = vadd.f32 0.0, %v1635
        %v1637 = vpop.f32.mrb[0].mxu0
        %1638 = vmatprep.mubr.f32.mxu0 0.0
        %1639 = vmatmul.mubr.f32.gmra.mrb[0].mxu0 %v1509
        %v1640 = vpop.f32.mrb[0].mxu0
        %v1641 = vadd.f32 0.0, %v1640
        %v1642 = vpop.f32.mrb[0].mxu0
        %1643 = vmatprep.mubr.f32.mxu0 0.0
        %1644 = vmatmul.mubr.f32.gmra.mrb[0].mxu0 %v1512
        %v1645 = vpop.f32.mrb[0].mxu0
        %v1646 = vadd.f32 0.0, %v1645
        %v1647 = vpop.f32.mrb[0].mxu0
        %1648 = vmatprep.mubr.f32.mxu0 0.0
        %1649 = vmatmul.mubr.f32.gmra.mrb[0].mxu0 %v1515
        %v1650 = vpop.f32.mrb[0].mxu0
        %v1651 = vadd.f32 0.0, %v1650
        %v1652 = vpop.f32.mrb[0].mxu0
        %1653 = vmatprep.mubr.f32.mxu0 0.0
        %1654 = vmatmul.mubr.f32.gmra.mrb[0].mxu0 %v1518
        %v1655 = vpop.f32.mrb[0].mxu0
        %v1656 = vadd.f32 0.0, %v1655
        %v1657 = vpop.f32.mrb[0].mxu0
        %1658 = vmatprep.mubr.f32.mxu0 0.0
        %1659 = vmatmul.mubr.f32.gmra.mrb[0].mxu0 %v1521
        %v1660 = vpop.f32.mrb[0].mxu0
        %v1661 = vadd.f32 0.0, %v1660
        %v1662 = vpop.f32.mrb[0].mxu0
        %1663 = vmatprep.mubr.f32.mxu0 0.0
        %1664 = vmatmul.mubr.f32.gmra.mrb[0].mxu0 %v1524
        %v1665 = vpop.f32.mrb[0].mxu0
        %v1666 = vadd.f32 0.0, %v1665
        %v1667 = vpop.f32.mrb[0].mxu0
        %1668 = vmatprep.mubr.f32.mxu0 0.0
        %1669 = vmatmul.mubr.f32.gmra.mrb[0].mxu0 %v1527
        %v1670 = vpop.f32.mrb[0].mxu0
        %v1671 = vadd.f32 0.0, %v1670
        %v1672 = vpop.f32.mrb[0].mxu0
        %1673 = vdwg.mxu0
        %v1674 = vadd.f32 %v1399, %v1596
        %v1675 = vadd.f32 %v1404, %v1601
        %v1676 = vadd.f32 %v1409, %v1606
        %v1677 = vadd.f32 %v1414, %v1611
        %v1678 = vadd.f32 %v1419, %v1616
        %v1679 = vadd.f32 %v1424, %v1621
        %v1680 = vadd.f32 %v1429, %v1626
        %v1681 = vadd.f32 %v1434, %v1631
        %v1682 = vadd.f32 %v1439, %v1636
        %v1683 = vadd.f32 %v1444, %v1641
        %v1684 = vadd.f32 %v1449, %v1646
        %v1685 = vadd.f32 %v1454, %v1651
        %v1686 = vadd.f32 %v1459, %v1656
        %v1687 = vadd.f32 %v1464, %v1661
        %v1688 = vadd.f32 %v1469, %v1666
        %v1689 = vadd.f32 %v1474, %v1671
        %v1690 = vld [vmem:[%s7] sm:$0x1]
        %v1692 = vlaneseq
        %v1693 = vshrl.u32 %v1692, 7
        %v1694 = vsub.s32 0, %v1693
        %v1695 = vrot.slane %v1690, %v1694
        %v1697 = vadd.f32 %v1674, %v1695
        %v1698 = vadd.f32 %v1675, %v1695
        %v1699 = vadd.f32 %v1676, %v1695
        %v1700 = vadd.f32 %v1677, %v1695
        %v1701 = vadd.f32 %v1678, %v1695
        %v1702 = vadd.f32 %v1679, %v1695
        %v1703 = vadd.f32 %v1680, %v1695
        %v1704 = vadd.f32 %v1681, %v1695
        %v1705 = vadd.f32 %v1682, %v1695
        %v1706 = vadd.f32 %v1683, %v1695
        %v1707 = vadd.f32 %v1684, %v1695
        %v1708 = vadd.f32 %v1685, %v1695
        %v1709 = vadd.f32 %v1686, %v1695
        %v1710 = vadd.f32 %v1687, %v1695
        %v1711 = vadd.f32 %v1688, %v1695
        %v1712 = vadd.f32 %v1689, %v1695
        %v1713 = vld [vmem:[%s8] sm:$0xff]
        %v1714 = vld [vmem:[%s8 + $0x8] sm:$0xff]
        %v1715 = vld [vmem:[%s8 + $0x10] sm:$0xff]
        %v1716 = vld [vmem:[%s8 + $0x18] sm:$0xff]
        %v1717 = vld [vmem:[%s8 + $0x20] sm:$0xff]
        %v1718 = vld [vmem:[%s8 + $0x28] sm:$0xff]
        %v1719 = vld [vmem:[%s8 + $0x30] sm:$0xff]
        %v1720 = vld [vmem:[%s8 + $0x38] sm:$0xff]
        %v1721 = vld [vmem:[%s8 + $0x40] sm:$0xff]
        %v1722 = vld [vmem:[%s8 + $0x48] sm:$0xff]
        %v1723 = vld [vmem:[%s8 + $0x50] sm:$0xff]
        %v1724 = vld [vmem:[%s8 + $0x58] sm:$0xff]
        %v1725 = vld [vmem:[%s8 + $0x60] sm:$0xff]
        %v1726 = vld [vmem:[%s8 + $0x68] sm:$0xff]
        %v1727 = vld [vmem:[%s8 + $0x70] sm:$0xff]
        %v1728 = vld [vmem:[%s8 + $0x78] sm:$0xff]
        %1729 = vmatprep.subr.mxu0 0.0
        %1730 = vmatpush1.msra.mxu0 %v1721
        %1731 = vmatprep.subr.mxu0 0.0
        %1732 = vmatpush1.msra.mxu0 %v1722
        %1733 = vmatprep.subr.mxu0 0.0
        %1734 = vmatpush1.msra.mxu0 %v1723
        %1735 = vmatprep.subr.mxu0 0.0
        %1736 = vmatpush1.msra.mxu0 %v1724
        %1737 = vmatprep.subr.mxu0 0.0
        %1738 = vmatpush1.msra.mxu0 %v1725
        %1739 = vmatprep.subr.mxu0 0.0
        %1740 = vmatpush1.msra.mxu0 %v1726
        %1741 = vmatprep.subr.mxu0 0.0
        %1742 = vmatpush1.msra.mxu0 %v1727
        %1743 = vmatprep.subr.mxu0 0.0
        %1744 = vmatpush1.msra.mxu0 %v1728
        %1745 = vmatprep.subr.mxu0 0.0
        %1746 = vmatpush1.msra.mxu0 0.0
        %1747 = vmatprep.subr.mxu0 0.0
        %1748 = vmatpush1.msra.mxu0 0.0
        %1749 = vmatprep.subr.mxu0 0.0
        %1750 = vmatpush1.msra.mxu0 0.0
        %1751 = vmatprep.subr.mxu0 0.0
        %1752 = vmatpush1.msra.mxu0 0.0
        %1753 = vmatprep.subr.mxu0 0.0
        %1754 = vmatpush1.msra.mxu0 0.0
        %1755 = vmatprep.subr.mxu0 0.0
        %1756 = vmatpush1.msra.mxu0 0.0
        %1757 = vmatprep.subr.mxu0 0.0
        %1758 = vmatpush1.msra.mxu0 0.0
        %1759 = vmatprep.subr.mxu0 0.0
        %1760 = vmatpush1.msra.mxu0 0.0
        %1761 = vmatprep.subr.mxu0 0.0
        %1762 = vmatpush1.msra.mxu0 0.0
        %1763 = vmatprep.subr.mxu0 0.0
        %1764 = vmatpush1.msra.mxu0 0.0
        %1765 = vmatprep.subr.mxu0 0.0
        %1766 = vmatpush1.msra.mxu0 0.0
        %1767 = vmatprep.subr.mxu0 0.0
        %1768 = vmatpush1.msra.mxu0 0.0
        %1769 = vmatprep.subr.mxu0 0.0
        %1770 = vmatpush1.msra.mxu0 0.0
        %1771 = vmatprep.subr.mxu0 0.0
        %1772 = vmatpush1.msra.mxu0 0.0
        %1773 = vmatprep.subr.mxu0 0.0
        %1774 = vmatpush1.msra.mxu0 0.0
        %1775 = vmatprep.subr.mxu0 0.0
        %1776 = vmatpush1.msra.mxu0 0.0
        %1777 = vmatprep.subr.mxu0 0.0
        %1778 = vmatpush1.msra.mxu0 0.0
        %1779 = vmatprep.subr.mxu0 0.0
        %1780 = vmatpush1.msra.mxu0 0.0
        %1781 = vmatprep.subr.mxu0 0.0
        %1782 = vmatpush1.msra.mxu0 0.0
        %1783 = vmatprep.subr.mxu0 0.0
        %1784 = vmatpush1.msra.mxu0 0.0
        %1785 = vmatprep.subr.mxu0 0.0
        %1786 = vmatpush1.msra.mxu0 0.0
        %1787 = vmatprep.subr.mxu0 0.0
        %1788 = vmatpush1.msra.mxu0 0.0
        %1789 = vmatprep.subr.mxu0 0.0
        %1790 = vmatpush1.msra.mxu0 0.0
        %1791 = vmatprep.subr.mxu0 0.0
        %1792 = vmatpush1.msra.mxu0 0.0
        %1793 = vmatprep.mubr.f32.mxu0 0.0
        %1794 = vmatmul.mubr.f32.gmra.mrb[0].mxu0 %v1092
        %v1795 = vpop.f32.mrb[0].mxu0
        %v1796 = vadd.f32 0.0, %v1795
        %v1797 = vpop.f32.mrb[0].mxu0
        %1798 = vmatprep.mubr.f32.mxu0 0.0
        %1799 = vmatmul.mubr.f32.gmra.mrb[0].mxu0 %v1095
        %v1800 = vpop.f32.mrb[0].mxu0
        %v1801 = vadd.f32 0.0, %v1800
        %v1802 = vpop.f32.mrb[0].mxu0
        %1803 = vmatprep.mubr.f32.mxu0 0.0
        %1804 = vmatmul.mubr.f32.gmra.mrb[0].mxu0 %v1098
        %v1805 = vpop.f32.mrb[0].mxu0
        %v1806 = vadd.f32 0.0, %v1805
        %v1807 = vpop.f32.mrb[0].mxu0
        %1808 = vmatprep.mubr.f32.mxu0 0.0
        %1809 = vmatmul.mubr.f32.gmra.mrb[0].mxu0 %v1101
        %v1810 = vpop.f32.mrb[0].mxu0
        %v1811 = vadd.f32 0.0, %v1810
        %v1812 = vpop.f32.mrb[0].mxu0
        %1813 = vmatprep.mubr.f32.mxu0 0.0
        %1814 = vmatmul.mubr.f32.gmra.mrb[0].mxu0 %v1104
        %v1815 = vpop.f32.mrb[0].mxu0
        %v1816 = vadd.f32 0.0, %v1815
        %v1817 = vpop.f32.mrb[0].mxu0
        %1818 = vmatprep.mubr.f32.mxu0 0.0
        %1819 = vmatmul.mubr.f32.gmra.mrb[0].mxu0 %v1107
        %v1820 = vpop.f32.mrb[0].mxu0
        %v1821 = vadd.f32 0.0, %v1820
        %v1822 = vpop.f32.mrb[0].mxu0
        %1823 = vmatprep.mubr.f32.mxu0 0.0
        %1824 = vmatmul.mubr.f32.gmra.mrb[0].mxu0 %v1110
        %v1825 = vpop.f32.mrb[0].mxu0
        %v1826 = vadd.f32 0.0, %v1825
        %v1827 = vpop.f32.mrb[0].mxu0
        %1828 = vmatprep.mubr.f32.mxu0 0.0
        %1829 = vmatmul.mubr.f32.gmra.mrb[0].mxu0 %v1113
        %v1830 = vpop.f32.mrb[0].mxu0
        %v1831 = vadd.f32 0.0, %v1830
        %v1832 = vpop.f32.mrb[0].mxu0
        %1833 = vmatprep.mubr.f32.mxu0 0.0
        %1834 = vmatmul.mubr.f32.gmra.mrb[0].mxu0 %v1116
        %v1835 = vpop.f32.mrb[0].mxu0
        %v1836 = vadd.f32 0.0, %v1835
        %v1837 = vpop.f32.mrb[0].mxu0
        %1838 = vmatprep.mubr.f32.mxu0 0.0
        %1839 = vmatmul.mubr.f32.gmra.mrb[0].mxu0 %v1119
        %v1840 = vpop.f32.mrb[0].mxu0
        %v1841 = vadd.f32 0.0, %v1840
        %v1842 = vpop.f32.mrb[0].mxu0
        %1843 = vmatprep.mubr.f32.mxu0 0.0
        %1844 = vmatmul.mubr.f32.gmra.mrb[0].mxu0 %v1122
        %v1845 = vpop.f32.mrb[0].mxu0
        %v1846 = vadd.f32 0.0, %v1845
        %v1847 = vpop.f32.mrb[0].mxu0
        %1848 = vmatprep.mubr.f32.mxu0 0.0
        %1849 = vmatmul.mubr.f32.gmra.mrb[0].mxu0 %v1125
        %v1850 = vpop.f32.mrb[0].mxu0
        %v1851 = vadd.f32 0.0, %v1850
        %v1852 = vpop.f32.mrb[0].mxu0
        %1853 = vmatprep.mubr.f32.mxu0 0.0
        %1854 = vmatmul.mubr.f32.gmra.mrb[0].mxu0 %v1128
        %v1855 = vpop.f32.mrb[0].mxu0
        %v1856 = vadd.f32 0.0, %v1855
        %v1857 = vpop.f32.mrb[0].mxu0
        %1858 = vmatprep.mubr.f32.mxu0 0.0
        %1859 = vmatmul.mubr.f32.gmra.mrb[0].mxu0 %v1131
        %v1860 = vpop.f32.mrb[0].mxu0
        %v1861 = vadd.f32 0.0, %v1860
        %v1862 = vpop.f32.mrb[0].mxu0
        %1863 = vmatprep.mubr.f32.mxu0 0.0
        %1864 = vmatmul.mubr.f32.gmra.mrb[0].mxu0 %v1134
        %v1865 = vpop.f32.mrb[0].mxu0
        %v1866 = vadd.f32 0.0, %v1865
        %v1867 = vpop.f32.mrb[0].mxu0
        %1868 = vmatprep.mubr.f32.mxu0 0.0
        %1869 = vmatmul.mubr.f32.gmra.mrb[0].mxu0 %v1137
        %v1870 = vpop.f32.mrb[0].mxu0
        %v1871 = vadd.f32 0.0, %v1870
        %v1872 = vpop.f32.mrb[0].mxu0
        %1873 = vdwg.mxu0
        %1874 = vmatprep.subr.mxu0 0.0
        %1875 = vmatpush1.msra.mxu0 %v1713
        %1876 = vmatprep.subr.mxu0 0.0
        %1877 = vmatpush1.msra.mxu0 %v1714
        %1878 = vmatprep.subr.mxu0 0.0
        %1879 = vmatpush1.msra.mxu0 %v1715
        %1880 = vmatprep.subr.mxu0 0.0
        %1881 = vmatpush1.msra.mxu0 %v1716
        %1882 = vmatprep.subr.mxu0 0.0
        %1883 = vmatpush1.msra.mxu0 %v1717
        %1884 = vmatprep.subr.mxu0 0.0
        %1885 = vmatpush1.msra.mxu0 %v1718
        %1886 = vmatprep.subr.mxu0 0.0
        %1887 = vmatpush1.msra.mxu0 %v1719
        %1888 = vmatprep.subr.mxu0 0.0
        %1889 = vmatpush1.msra.mxu0 %v1720
        %1890 = vmatprep.subr.mxu0 0.0
        %1891 = vmatpush1.msra.mxu0 0.0
        %1892 = vmatprep.subr.mxu0 0.0
        %1893 = vmatpush1.msra.mxu0 0.0
        %1894 = vmatprep.subr.mxu0 0.0
        %1895 = vmatpush1.msra.mxu0 0.0
        %1896 = vmatprep.subr.mxu0 0.0
        %1897 = vmatpush1.msra.mxu0 0.0
        %1898 = vmatprep.subr.mxu0 0.0
        %1899 = vmatpush1.msra.mxu0 0.0
        %1900 = vmatprep.subr.mxu0 0.0
        %1901 = vmatpush1.msra.mxu0 0.0
        %1902 = vmatprep.subr.mxu0 0.0
        %1903 = vmatpush1.msra.mxu0 0.0
        %1904 = vmatprep.subr.mxu0 0.0
        %1905 = vmatpush1.msra.mxu0 0.0
        %1906 = vmatprep.subr.mxu0 0.0
        %1907 = vmatpush1.msra.mxu0 0.0
        %1908 = vmatprep.subr.mxu0 0.0
        %1909 = vmatpush1.msra.mxu0 0.0
        %1910 = vmatprep.subr.mxu0 0.0
        %1911 = vmatpush1.msra.mxu0 0.0
        %1912 = vmatprep.subr.mxu0 0.0
        %1913 = vmatpush1.msra.mxu0 0.0
        %1914 = vmatprep.subr.mxu0 0.0
        %1915 = vmatpush1.msra.mxu0 0.0
        %1916 = vmatprep.subr.mxu0 0.0
        %1917 = vmatpush1.msra.mxu0 0.0
        %1918 = vmatprep.subr.mxu0 0.0
        %1919 = vmatpush1.msra.mxu0 0.0
        %1920 = vmatprep.subr.mxu0 0.0
        %1921 = vmatpush1.msra.mxu0 0.0
        %1922 = vmatprep.subr.mxu0 0.0
        %1923 = vmatpush1.msra.mxu0 0.0
        %1924 = vmatprep.subr.mxu0 0.0
        %1925 = vmatpush1.msra.mxu0 0.0
        %1926 = vmatprep.subr.mxu0 0.0
        %1927 = vmatpush1.msra.mxu0 0.0
        %1928 = vmatprep.subr.mxu0 0.0
        %1929 = vmatpush1.msra.mxu0 0.0
        %1930 = vmatprep.subr.mxu0 0.0
        %1931 = vmatpush1.msra.mxu0 0.0
        %1932 = vmatprep.subr.mxu0 0.0
        %1933 = vmatpush1.msra.mxu0 0.0
        %1934 = vmatprep.subr.mxu0 0.0
        %1935 = vmatpush1.msra.mxu0 0.0
        %1936 = vmatprep.subr.mxu0 0.0
        %1937 = vmatpush1.msra.mxu0 0.0
        %1938 = vmatprep.mubr.f32.mxu0 0.0
        %1939 = vmatmul.mubr.f32.gmra.mrb[0].mxu0 %v1285
        %v1940 = vpop.f32.mrb[0].mxu0
        %v1941 = vadd.f32 %v1796, %v1940
        %v1942 = vpop.f32.mrb[0].mxu0
        %1943 = vmatprep.mubr.f32.mxu0 0.0
        %1944 = vmatmul.mubr.f32.gmra.mrb[0].mxu0 %v1288
        %v1945 = vpop.f32.mrb[0].mxu0
        %v1946 = vadd.f32 %v1801, %v1945
        %v1947 = vpop.f32.mrb[0].mxu0
        %1948 = vmatprep.mubr.f32.mxu0 0.0
        %1949 = vmatmul.mubr.f32.gmra.mrb[0].mxu0 %v1291
        %v1950 = vpop.f32.mrb[0].mxu0
        %v1951 = vadd.f32 %v1806, %v1950
        %v1952 = vpop.f32.mrb[0].mxu0
        %1953 = vmatprep.mubr.f32.mxu0 0.0
        %1954 = vmatmul.mubr.f32.gmra.mrb[0].mxu0 %v1294
        %v1955 = vpop.f32.mrb[0].mxu0
        %v1956 = vadd.f32 %v1811, %v1955
        %v1957 = vpop.f32.mrb[0].mxu0
        %1958 = vmatprep.mubr.f32.mxu0 0.0
        %1959 = vmatmul.mubr.f32.gmra.mrb[0].mxu0 %v1297
        %v1960 = vpop.f32.mrb[0].mxu0
        %v1961 = vadd.f32 %v1816, %v1960
        %v1962 = vpop.f32.mrb[0].mxu0
        %1963 = vmatprep.mubr.f32.mxu0 0.0
        %1964 = vmatmul.mubr.f32.gmra.mrb[0].mxu0 %v1300
        %v1965 = vpop.f32.mrb[0].mxu0
        %v1966 = vadd.f32 %v1821, %v1965
        %v1967 = vpop.f32.mrb[0].mxu0
        %1968 = vmatprep.mubr.f32.mxu0 0.0
        %1969 = vmatmul.mubr.f32.gmra.mrb[0].mxu0 %v1303
        %v1970 = vpop.f32.mrb[0].mxu0
        %v1971 = vadd.f32 %v1826, %v1970
        %v1972 = vpop.f32.mrb[0].mxu0
        %1973 = vmatprep.mubr.f32.mxu0 0.0
        %1974 = vmatmul.mubr.f32.gmra.mrb[0].mxu0 %v1306
        %v1975 = vpop.f32.mrb[0].mxu0
        %v1976 = vadd.f32 %v1831, %v1975
        %v1977 = vpop.f32.mrb[0].mxu0
        %1978 = vmatprep.mubr.f32.mxu0 0.0
        %1979 = vmatmul.mubr.f32.gmra.mrb[0].mxu0 %v1309
        %v1980 = vpop.f32.mrb[0].mxu0
        %v1981 = vadd.f32 %v1836, %v1980
        %v1982 = vpop.f32.mrb[0].mxu0
        %1983 = vmatprep.mubr.f32.mxu0 0.0
        %1984 = vmatmul.mubr.f32.gmra.mrb[0].mxu0 %v1312
        %v1985 = vpop.f32.mrb[0].mxu0
        %v1986 = vadd.f32 %v1841, %v1985
        %v1987 = vpop.f32.mrb[0].mxu0
        %1988 = vmatprep.mubr.f32.mxu0 0.0
        %1989 = vmatmul.mubr.f32.gmra.mrb[0].mxu0 %v1315
        %v1990 = vpop.f32.mrb[0].mxu0
        %v1991 = vadd.f32 %v1846, %v1990
        %v1992 = vpop.f32.mrb[0].mxu0
        %1993 = vmatprep.mubr.f32.mxu0 0.0
        %1994 = vmatmul.mubr.f32.gmra.mrb[0].mxu0 %v1318
        %v1995 = vpop.f32.mrb[0].mxu0
        %v1996 = vadd.f32 %v1851, %v1995
        %v1997 = vpop.f32.mrb[0].mxu0
        %1998 = vmatprep.mubr.f32.mxu0 0.0
        %1999 = vmatmul.mubr.f32.gmra.mrb[0].mxu0 %v1321
        %v2000 = vpop.f32.mrb[0].mxu0
        %v2001 = vadd.f32 %v1856, %v2000
        %v2002 = vpop.f32.mrb[0].mxu0
        %2003 = vmatprep.mubr.f32.mxu0 0.0
        %2004 = vmatmul.mubr.f32.gmra.mrb[0].mxu0 %v1324
        %v2005 = vpop.f32.mrb[0].mxu0
        %v2006 = vadd.f32 %v1861, %v2005
        %v2007 = vpop.f32.mrb[0].mxu0
        %2008 = vmatprep.mubr.f32.mxu0 0.0
        %2009 = vmatmul.mubr.f32.gmra.mrb[0].mxu0 %v1327
        %v2010 = vpop.f32.mrb[0].mxu0
        %v2011 = vadd.f32 %v1866, %v2010
        %v2012 = vpop.f32.mrb[0].mxu0
        %2013 = vmatprep.mubr.f32.mxu0 0.0
        %2014 = vmatmul.mubr.f32.gmra.mrb[0].mxu0 %v1330
        %v2015 = vpop.f32.mrb[0].mxu0
        %v2016 = vadd.f32 %v1871, %v2015
        %v2017 = vpop.f32.mrb[0].mxu0
        %2018 = vdwg.mxu0
        %v2019 = vld [vmem:[%s8 + $0x80] sm:$0xff]
        %v2020 = vld [vmem:[%s8 + $0x88] sm:$0xff]
        %v2021 = vld [vmem:[%s8 + $0x90] sm:$0xff]
        %v2022 = vld [vmem:[%s8 + $0x98] sm:$0xff]
        %2023 = vmatprep.subr.mxu0 0.0
        %2024 = vmatpush1.msra.mxu0 %v2019
        %2025 = vmatprep.subr.mxu0 0.0
        %2026 = vmatpush1.msra.mxu0 %v2020
        %2027 = vmatprep.subr.mxu0 0.0
        %2028 = vmatpush1.msra.mxu0 %v2021
        %2029 = vmatprep.subr.mxu0 0.0
        %2030 = vmatpush1.msra.mxu0 %v2022
        %2031 = vmatprep.subr.mxu0 0.0
        %2032 = vmatpush1.msra.mxu0 0.0
        %2033 = vmatprep.subr.mxu0 0.0
        %2034 = vmatpush1.msra.mxu0 0.0
        %2035 = vmatprep.subr.mxu0 0.0
        %2036 = vmatpush1.msra.mxu0 0.0
        %2037 = vmatprep.subr.mxu0 0.0
        %2038 = vmatpush1.msra.mxu0 0.0
        %2039 = vmatprep.subr.mxu0 0.0
        %2040 = vmatpush1.msra.mxu0 0.0
        %2041 = vmatprep.subr.mxu0 0.0
        %2042 = vmatpush1.msra.mxu0 0.0
        %2043 = vmatprep.subr.mxu0 0.0
        %2044 = vmatpush1.msra.mxu0 0.0
        %2045 = vmatprep.subr.mxu0 0.0
        %2046 = vmatpush1.msra.mxu0 0.0
        %2047 = vmatprep.subr.mxu0 0.0
        %2048 = vmatpush1.msra.mxu0 0.0
        %2049 = vmatprep.subr.mxu0 0.0
        %2050 = vmatpush1.msra.mxu0 0.0
        %2051 = vmatprep.subr.mxu0 0.0
        %2052 = vmatpush1.msra.mxu0 0.0
        %2053 = vmatprep.subr.mxu0 0.0
        %2054 = vmatpush1.msra.mxu0 0.0
        %2055 = vmatprep.subr.mxu0 0.0
        %2056 = vmatpush1.msra.mxu0 0.0
        %2057 = vmatprep.subr.mxu0 0.0
        %2058 = vmatpush1.msra.mxu0 0.0
        %2059 = vmatprep.subr.mxu0 0.0
        %2060 = vmatpush1.msra.mxu0 0.0
        %2061 = vmatprep.subr.mxu0 0.0
        %2062 = vmatpush1.msra.mxu0 0.0
        %2063 = vmatprep.subr.mxu0 0.0
        %2064 = vmatpush1.msra.mxu0 0.0
        %2065 = vmatprep.subr.mxu0 0.0
        %2066 = vmatpush1.msra.mxu0 0.0
        %2067 = vmatprep.subr.mxu0 0.0
        %2068 = vmatpush1.msra.mxu0 0.0
        %2069 = vmatprep.subr.mxu0 0.0
        %2070 = vmatpush1.msra.mxu0 0.0
        %2071 = vmatprep.subr.mxu0 0.0
        %2072 = vmatpush1.msra.mxu0 0.0
        %2073 = vmatprep.subr.mxu0 0.0
        %2074 = vmatpush1.msra.mxu0 0.0
        %2075 = vmatprep.subr.mxu0 0.0
        %2076 = vmatpush1.msra.mxu0 0.0
        %2077 = vmatprep.subr.mxu0 0.0
        %2078 = vmatpush1.msra.mxu0 0.0
        %2079 = vmatprep.subr.mxu0 0.0
        %2080 = vmatpush1.msra.mxu0 0.0
        %2081 = vmatprep.subr.mxu0 0.0
        %2082 = vmatpush1.msra.mxu0 0.0
        %2083 = vmatprep.subr.mxu0 0.0
        %2084 = vmatpush1.msra.mxu0 0.0
        %2085 = vmatprep.subr.mxu0 0.0
        %2086 = vmatpush1.msra.mxu0 0.0
        %2087 = vmatprep.mubr.f32.mxu0 0.0
        %2088 = vmatmul.mubr.f32.gmra.mrb[0].mxu0 %v1482
        %v2089 = vpop.f32.mrb[0].mxu0
        %v2090 = vadd.f32 0.0, %v2089
        %v2091 = vpop.f32.mrb[0].mxu0
        %2092 = vmatprep.mubr.f32.mxu0 0.0
        %2093 = vmatmul.mubr.f32.gmra.mrb[0].mxu0 %v1485
        %v2094 = vpop.f32.mrb[0].mxu0
        %v2095 = vadd.f32 0.0, %v2094
        %v2096 = vpop.f32.mrb[0].mxu0
        %2097 = vmatprep.mubr.f32.mxu0 0.0
        %2098 = vmatmul.mubr.f32.gmra.mrb[0].mxu0 %v1488
        %v2099 = vpop.f32.mrb[0].mxu0
        %v2100 = vadd.f32 0.0, %v2099
        %v2101 = vpop.f32.mrb[0].mxu0
        %2102 = vmatprep.mubr.f32.mxu0 0.0
        %2103 = vmatmul.mubr.f32.gmra.mrb[0].mxu0 %v1491
        %v2104 = vpop.f32.mrb[0].mxu0
        %v2105 = vadd.f32 0.0, %v2104
        %v2106 = vpop.f32.mrb[0].mxu0
        %2107 = vmatprep.mubr.f32.mxu0 0.0
        %2108 = vmatmul.mubr.f32.gmra.mrb[0].mxu0 %v1494
        %v2109 = vpop.f32.mrb[0].mxu0
        %v2110 = vadd.f32 0.0, %v2109
        %v2111 = vpop.f32.mrb[0].mxu0
        %2112 = vmatprep.mubr.f32.mxu0 0.0
        %2113 = vmatmul.mubr.f32.gmra.mrb[0].mxu0 %v1497
        %v2114 = vpop.f32.mrb[0].mxu0
        %v2115 = vadd.f32 0.0, %v2114
        %v2116 = vpop.f32.mrb[0].mxu0
        %2117 = vmatprep.mubr.f32.mxu0 0.0
        %2118 = vmatmul.mubr.f32.gmra.mrb[0].mxu0 %v1500
        %v2119 = vpop.f32.mrb[0].mxu0
        %v2120 = vadd.f32 0.0, %v2119
        %v2121 = vpop.f32.mrb[0].mxu0
        %2122 = vmatprep.mubr.f32.mxu0 0.0
        %2123 = vmatmul.mubr.f32.gmra.mrb[0].mxu0 %v1503
        %v2124 = vpop.f32.mrb[0].mxu0
        %v2125 = vadd.f32 0.0, %v2124
        %v2126 = vpop.f32.mrb[0].mxu0
        %2127 = vmatprep.mubr.f32.mxu0 0.0
        %2128 = vmatmul.mubr.f32.gmra.mrb[0].mxu0 %v1506
        %v2129 = vpop.f32.mrb[0].mxu0
        %v2130 = vadd.f32 0.0, %v2129
        %v2131 = vpop.f32.mrb[0].mxu0
        %2132 = vmatprep.mubr.f32.mxu0 0.0
        %2133 = vmatmul.mubr.f32.gmra.mrb[0].mxu0 %v1509
        %v2134 = vpop.f32.mrb[0].mxu0
        %v2135 = vadd.f32 0.0, %v2134
        %v2136 = vpop.f32.mrb[0].mxu0
        %2137 = vmatprep.mubr.f32.mxu0 0.0
        %2138 = vmatmul.mubr.f32.gmra.mrb[0].mxu0 %v1512
        %v2139 = vpop.f32.mrb[0].mxu0
        %v2140 = vadd.f32 0.0, %v2139
        %v2141 = vpop.f32.mrb[0].mxu0
        %2142 = vmatprep.mubr.f32.mxu0 0.0
        %2143 = vmatmul.mubr.f32.gmra.mrb[0].mxu0 %v1515
        %v2144 = vpop.f32.mrb[0].mxu0
        %v2145 = vadd.f32 0.0, %v2144
        %v2146 = vpop.f32.mrb[0].mxu0
        %2147 = vmatprep.mubr.f32.mxu0 0.0
        %2148 = vmatmul.mubr.f32.gmra.mrb[0].mxu0 %v1518
        %v2149 = vpop.f32.mrb[0].mxu0
        %v2150 = vadd.f32 0.0, %v2149
        %v2151 = vpop.f32.mrb[0].mxu0
        %2152 = vmatprep.mubr.f32.mxu0 0.0
        %2153 = vmatmul.mubr.f32.gmra.mrb[0].mxu0 %v1521
        %v2154 = vpop.f32.mrb[0].mxu0
        %v2155 = vadd.f32 0.0, %v2154
        %v2156 = vpop.f32.mrb[0].mxu0
        %2157 = vmatprep.mubr.f32.mxu0 0.0
        %2158 = vmatmul.mubr.f32.gmra.mrb[0].mxu0 %v1524
        %v2159 = vpop.f32.mrb[0].mxu0
        %v2160 = vadd.f32 0.0, %v2159
        %v2161 = vpop.f32.mrb[0].mxu0
        %2162 = vmatprep.mubr.f32.mxu0 0.0
        %2163 = vmatmul.mubr.f32.gmra.mrb[0].mxu0 %v1527
        %v2164 = vpop.f32.mrb[0].mxu0
        %v2165 = vadd.f32 0.0, %v2164
        %v2166 = vpop.f32.mrb[0].mxu0
        %2167 = vdwg.mxu0
        %v2168 = vadd.f32 %v1941, %v2090
        %v2169 = vadd.f32 %v1946, %v2095
        %v2170 = vadd.f32 %v1951, %v2100
        %v2171 = vadd.f32 %v1956, %v2105
        %v2172 = vadd.f32 %v1961, %v2110
        %v2173 = vadd.f32 %v1966, %v2115
        %v2174 = vadd.f32 %v1971, %v2120
        %v2175 = vadd.f32 %v1976, %v2125
        %v2176 = vadd.f32 %v1981, %v2130
        %v2177 = vadd.f32 %v1986, %v2135
        %v2178 = vadd.f32 %v1991, %v2140
        %v2179 = vadd.f32 %v1996, %v2145
        %v2180 = vadd.f32 %v2001, %v2150
        %v2181 = vadd.f32 %v2006, %v2155
        %v2182 = vadd.f32 %v2011, %v2160
        %v2183 = vadd.f32 %v2016, %v2165
        %v2184 = vld [vmem:[%s9] sm:$0x1]
        %v2186 = vlaneseq
        %v2187 = vshrl.u32 %v2186, 7
        %v2188 = vsub.s32 0, %v2187
        %v2189 = vrot.slane %v2184, %v2188
        %v2191 = vadd.f32 %v2168, %v2189
        %v2192 = vadd.f32 %v2169, %v2189
        %v2193 = vadd.f32 %v2170, %v2189
        %v2194 = vadd.f32 %v2171, %v2189
        %v2195 = vadd.f32 %v2172, %v2189
        %v2196 = vadd.f32 %v2173, %v2189
        %v2197 = vadd.f32 %v2174, %v2189
        %v2198 = vadd.f32 %v2175, %v2189
        %v2199 = vadd.f32 %v2176, %v2189
        %v2200 = vadd.f32 %v2177, %v2189
        %v2201 = vadd.f32 %v2178, %v2189
        %v2202 = vadd.f32 %v2179, %v2189
        %v2203 = vadd.f32 %v2180, %v2189
        %v2204 = vadd.f32 %v2181, %v2189
        %v2205 = vadd.f32 %v2182, %v2189
        %v2206 = vadd.f32 %v2183, %v2189
        %v2207 = vsub.f32 0.0, %v1697
        %v2208 = vsub.f32 0.0, %v1698
        %v2209 = vsub.f32 0.0, %v1699
        %v2210 = vsub.f32 0.0, %v1700
        %v2211 = vsub.f32 0.0, %v1701
        %v2212 = vsub.f32 0.0, %v1702
        %v2213 = vsub.f32 0.0, %v1703
        %v2214 = vsub.f32 0.0, %v1704
        %v2215 = vsub.f32 0.0, %v1705
        %v2216 = vsub.f32 0.0, %v1706
        %v2217 = vsub.f32 0.0, %v1707
        %v2218 = vsub.f32 0.0, %v1708
        %v2219 = vsub.f32 0.0, %v1709
        %v2220 = vsub.f32 0.0, %v1710
        %v2221 = vsub.f32 0.0, %v1711
        %v2222 = vsub.f32 0.0, %v1712
        %v2223 = vmul.f32 %v2207, 1.442695
        %v2224 = vpow.pop %v2223
        %v2225 = vmul.f32 %v2208, 1.442695
        %v2226 = vpow.pop %v2225
        %v2227 = vmul.f32 %v2209, 1.442695
        %v2228 = vpow.pop %v2227
        %v2229 = vmul.f32 %v2210, 1.442695
        %v2230 = vpow.pop %v2229
        %v2231 = vmul.f32 %v2211, 1.442695
        %v2232 = vpow.pop %v2231
        %v2233 = vmul.f32 %v2212, 1.442695
        %v2234 = vpow.pop %v2233
        %v2235 = vmul.f32 %v2213, 1.442695
        %v2236 = vpow.pop %v2235
        %v2237 = vmul.f32 %v2214, 1.442695
        %v2238 = vpow.pop %v2237
        %v2239 = vmul.f32 %v2215, 1.442695
        %v2240 = vpow.pop %v2239
        %v2241 = vmul.f32 %v2216, 1.442695
        %v2242 = vpow.pop %v2241
        %v2243 = vmul.f32 %v2217, 1.442695
        %v2244 = vpow.pop %v2243
        %v2245 = vmul.f32 %v2218, 1.442695
        %v2246 = vpow.pop %v2245
        %v2247 = vmul.f32 %v2219, 1.442695
        %v2248 = vpow.pop %v2247
        %v2249 = vmul.f32 %v2220, 1.442695
        %v2250 = vpow.pop %v2249
        %v2251 = vmul.f32 %v2221, 1.442695
        %v2252 = vpow.pop %v2251
        %v2253 = vmul.f32 %v2222, 1.442695
        %v2254 = vpow.pop %v2253
        %v2255 = vadd.f32 %v2224, 1.0
        %v2256 = vadd.f32 %v2226, 1.0
        %v2257 = vadd.f32 %v2228, 1.0
        %v2258 = vadd.f32 %v2230, 1.0
        %v2259 = vadd.f32 %v2232, 1.0
        %v2260 = vadd.f32 %v2234, 1.0
        %v2261 = vadd.f32 %v2236, 1.0
        %v2262 = vadd.f32 %v2238, 1.0
        %v2263 = vadd.f32 %v2240, 1.0
        %v2264 = vadd.f32 %v2242, 1.0
        %v2265 = vadd.f32 %v2244, 1.0
        %v2266 = vadd.f32 %v2246, 1.0
        %v2267 = vadd.f32 %v2248, 1.0
        %v2268 = vadd.f32 %v2250, 1.0
        %v2269 = vadd.f32 %v2252, 1.0
        %v2270 = vadd.f32 %v2254, 1.0
        %v2271 = vrcp.pop %v2255
        %v2272 = vmul.f32 1.0, %v2271
        %v2273 = vrcp.pop %v2256
        %v2274 = vmul.f32 1.0, %v2273
        %v2275 = vrcp.pop %v2257
        %v2276 = vmul.f32 1.0, %v2275
        %v2277 = vrcp.pop %v2258
        %v2278 = vmul.f32 1.0, %v2277
        %v2279 = vrcp.pop %v2259
        %v2280 = vmul.f32 1.0, %v2279
        %v2281 = vrcp.pop %v2260
        %v2282 = vmul.f32 1.0, %v2281
        %v2283 = vrcp.pop %v2261
        %v2284 = vmul.f32 1.0, %v2283
        %v2285 = vrcp.pop %v2262
        %v2286 = vmul.f32 1.0, %v2285
        %v2287 = vrcp.pop %v2263
        %v2288 = vmul.f32 1.0, %v2287
        %v2289 = vrcp.pop %v2264
        %v2290 = vmul.f32 1.0, %v2289
        %v2291 = vrcp.pop %v2265
        %v2292 = vmul.f32 1.0, %v2291
        %v2293 = vrcp.pop %v2266
        %v2294 = vmul.f32 1.0, %v2293
        %v2295 = vrcp.pop %v2267
        %v2296 = vmul.f32 1.0, %v2295
        %v2297 = vrcp.pop %v2268
        %v2298 = vmul.f32 1.0, %v2297
        %v2299 = vrcp.pop %v2269
        %v2300 = vmul.f32 1.0, %v2299
        %v2301 = vrcp.pop %v2270
        %v2302 = vmul.f32 1.0, %v2301
        %v2303 = vmax.f32 %v2191, 0.0
        %v2304 = vmax.f32 %v2192, 0.0
        %v2305 = vmax.f32 %v2193, 0.0
        %v2306 = vmax.f32 %v2194, 0.0
        %v2307 = vmax.f32 %v2195, 0.0
        %v2308 = vmax.f32 %v2196, 0.0
        %v2309 = vmax.f32 %v2197, 0.0
        %v2310 = vmax.f32 %v2198, 0.0
        %v2311 = vmax.f32 %v2199, 0.0
        %v2312 = vmax.f32 %v2200, 0.0
        %v2313 = vmax.f32 %v2201, 0.0
        %v2314 = vmax.f32 %v2202, 0.0
        %v2315 = vmax.f32 %v2203, 0.0
        %v2316 = vmax.f32 %v2204, 0.0
        %v2317 = vmax.f32 %v2205, 0.0
        %v2318 = vmax.f32 %v2206, 0.0
        %v2319 = vand.u32 2147483647, %v2191
        %v2320 = vand.u32 2147483647, %v2192
        %v2321 = vand.u32 2147483647, %v2193
        %v2322 = vand.u32 2147483647, %v2194
        %v2323 = vand.u32 2147483647, %v2195
        %v2324 = vand.u32 2147483647, %v2196
        %v2325 = vand.u32 2147483647, %v2197
        %v2326 = vand.u32 2147483647, %v2198
        %v2327 = vand.u32 2147483647, %v2199
        %v2328 = vand.u32 2147483647, %v2200
        %v2329 = vand.u32 2147483647, %v2201
        %v2330 = vand.u32 2147483647, %v2202
        %v2331 = vand.u32 2147483647, %v2203
        %v2332 = vand.u32 2147483647, %v2204
        %v2333 = vand.u32 2147483647, %v2205
        %v2334 = vand.u32 2147483647, %v2206
        %v2335 = vsub.f32 0.0, %v2319
        %v2336 = vsub.f32 0.0, %v2320
        %v2337 = vsub.f32 0.0, %v2321
        %v2338 = vsub.f32 0.0, %v2322
        %v2339 = vsub.f32 0.0, %v2323
        %v2340 = vsub.f32 0.0, %v2324
        %v2341 = vsub.f32 0.0, %v2325
        %v2342 = vsub.f32 0.0, %v2326
        %v2343 = vsub.f32 0.0, %v2327
        %v2344 = vsub.f32 0.0, %v2328
        %v2345 = vsub.f32 0.0, %v2329
        %v2346 = vsub.f32 0.0, %v2330
        %v2347 = vsub.f32 0.0, %v2331
        %v2348 = vsub.f32 0.0, %v2332
        %v2349 = vsub.f32 0.0, %v2333
        %v2350 = vsub.f32 0.0, %v2334
        %v2351 = vmul.f32 %v2335, 1.442695
        %v2352 = vpow.pop %v2351
        %v2353 = vmul.f32 %v2336, 1.442695
        %v2354 = vpow.pop %v2353
        %v2355 = vmul.f32 %v2337, 1.442695
        %v2356 = vpow.pop %v2355
        %v2357 = vmul.f32 %v2338, 1.442695
        %v2358 = vpow.pop %v2357
        %v2359 = vmul.f32 %v2339, 1.442695
        %v2360 = vpow.pop %v2359
        %v2361 = vmul.f32 %v2340, 1.442695
        %v2362 = vpow.pop %v2361
        %v2363 = vmul.f32 %v2341, 1.442695
        %v2364 = vpow.pop %v2363
        %v2365 = vmul.f32 %v2342, 1.442695
        %v2366 = vpow.pop %v2365
        %v2367 = vmul.f32 %v2343, 1.442695
        %v2368 = vpow.pop %v2367
        %v2369 = vmul.f32 %v2344, 1.442695
        %v2370 = vpow.pop %v2369
        %v2371 = vmul.f32 %v2345, 1.442695
        %v2372 = vpow.pop %v2371
        %v2373 = vmul.f32 %v2346, 1.442695
        %v2374 = vpow.pop %v2373
        %v2375 = vmul.f32 %v2347, 1.442695
        %v2376 = vpow.pop %v2375
        %v2377 = vmul.f32 %v2348, 1.442695
        %v2378 = vpow.pop %v2377
        %v2379 = vmul.f32 %v2349, 1.442695
        %v2380 = vpow.pop %v2379
        %v2381 = vmul.f32 %v2350, 1.442695
        %v2382 = vpow.pop %v2381
        %v2383 = vadd.f32 %v2352, 1.0
        %v2384 = vadd.f32 %v2354, 1.0
        %v2385 = vadd.f32 %v2356, 1.0
        %v2386 = vadd.f32 %v2358, 1.0
        %v2387 = vadd.f32 %v2360, 1.0
        %v2388 = vadd.f32 %v2362, 1.0
        %v2389 = vadd.f32 %v2364, 1.0
        %v2390 = vadd.f32 %v2366, 1.0
        %v2391 = vadd.f32 %v2368, 1.0
        %v2392 = vadd.f32 %v2370, 1.0
        %v2393 = vadd.f32 %v2372, 1.0
        %v2394 = vadd.f32 %v2374, 1.0
        %v2395 = vadd.f32 %v2376, 1.0
        %v2396 = vadd.f32 %v2378, 1.0
        %v2397 = vadd.f32 %v2380, 1.0
        %v2398 = vadd.f32 %v2382, 1.0
        %v2399 = vlog2.pop %v2383
        %v2400 = vmul.f32 %v2399, 0.6931472
        %v2401 = vlog2.pop %v2384
        %v2402 = vmul.f32 %v2401, 0.6931472
        %v2403 = vlog2.pop %v2385
        %v2404 = vmul.f32 %v2403, 0.6931472
        %v2405 = vlog2.pop %v2386
        %v2406 = vmul.f32 %v2405, 0.6931472
        %v2407 = vlog2.pop %v2387
        %v2408 = vmul.f32 %v2407, 0.6931472
        %v2409 = vlog2.pop %v2388
        %v2410 = vmul.f32 %v2409, 0.6931472
        %v2411 = vlog2.pop %v2389
        %v2412 = vmul.f32 %v2411, 0.6931472
        %v2413 = vlog2.pop %v2390
        %v2414 = vmul.f32 %v2413, 0.6931472
        %v2415 = vlog2.pop %v2391
        %v2416 = vmul.f32 %v2415, 0.6931472
        %v2417 = vlog2.pop %v2392
        %v2418 = vmul.f32 %v2417, 0.6931472
        %v2419 = vlog2.pop %v2393
        %v2420 = vmul.f32 %v2419, 0.6931472
        %v2421 = vlog2.pop %v2394
        %v2422 = vmul.f32 %v2421, 0.6931472
        %v2423 = vlog2.pop %v2395
        %v2424 = vmul.f32 %v2423, 0.6931472
        %v2425 = vlog2.pop %v2396
        %v2426 = vmul.f32 %v2425, 0.6931472
        %v2427 = vlog2.pop %v2397
        %v2428 = vmul.f32 %v2427, 0.6931472
        %v2429 = vlog2.pop %v2398
        %v2430 = vmul.f32 %v2429, 0.6931472
        %v2431 = vadd.f32 %v2303, %v2400
        %v2432 = vadd.f32 %v2304, %v2402
        %v2433 = vadd.f32 %v2305, %v2404
        %v2434 = vadd.f32 %v2306, %v2406
        %v2435 = vadd.f32 %v2307, %v2408
        %v2436 = vadd.f32 %v2308, %v2410
        %v2437 = vadd.f32 %v2309, %v2412
        %v2438 = vadd.f32 %v2310, %v2414
        %v2439 = vadd.f32 %v2311, %v2416
        %v2440 = vadd.f32 %v2312, %v2418
        %v2441 = vadd.f32 %v2313, %v2420
        %v2442 = vadd.f32 %v2314, %v2422
        %v2443 = vadd.f32 %v2315, %v2424
        %v2444 = vadd.f32 %v2316, %v2426
        %v2445 = vadd.f32 %v2317, %v2428
        %v2446 = vadd.f32 %v2318, %v2430
        %v2447 = vmul.f32 %v2272, %v2431
        %v2448 = vmul.f32 %v2274, %v2432
        %v2449 = vmul.f32 %v2276, %v2433
        %v2450 = vmul.f32 %v2278, %v2434
        %v2451 = vmul.f32 %v2280, %v2435
        %v2452 = vmul.f32 %v2282, %v2436
        %v2453 = vmul.f32 %v2284, %v2437
        %v2454 = vmul.f32 %v2286, %v2438
        %v2455 = vmul.f32 %v2288, %v2439
        %v2456 = vmul.f32 %v2290, %v2440
        %v2457 = vmul.f32 %v2292, %v2441
        %v2458 = vmul.f32 %v2294, %v2442
        %v2459 = vmul.f32 %v2296, %v2443
        %v2460 = vmul.f32 %v2298, %v2444
        %v2461 = vmul.f32 %v2300, %v2445
        %v2462 = vmul.f32 %v2302, %v2446
        %v2463 = vld [vmem:[%s426] sm:$0xff]
        %v2464 = vld [vmem:[%s426 + $0x8] sm:$0xff]
        %v2465 = vld [vmem:[%s426 + $0x10] sm:$0xff]
        %v2466 = vld [vmem:[%s426 + $0x18] sm:$0xff]
        %v2467 = vld [vmem:[%s426 + $0x20] sm:$0xff]
        %v2468 = vld [vmem:[%s426 + $0x28] sm:$0xff]
        %v2469 = vld [vmem:[%s426 + $0x30] sm:$0xff]
        %v2470 = vld [vmem:[%s426 + $0x38] sm:$0xff]
        %v2471 = vld [vmem:[%s426 + $0x40] sm:$0xff]
        %v2472 = vld [vmem:[%s426 + $0x48] sm:$0xff]
        %v2473 = vld [vmem:[%s426 + $0x50] sm:$0xff]
        %v2474 = vld [vmem:[%s426 + $0x58] sm:$0xff]
        %v2475 = vld [vmem:[%s426 + $0x60] sm:$0xff]
        %v2476 = vld [vmem:[%s426 + $0x68] sm:$0xff]
        %v2477 = vld [vmem:[%s426 + $0x70] sm:$0xff]
        %v2478 = vld [vmem:[%s426 + $0x78] sm:$0xff]
        %v2479 = vmul.f32 %v2463, %v2463
        %v2480 = vmul.f32 %v2464, %v2464
        %v2481 = vmul.f32 %v2465, %v2465
        %v2482 = vmul.f32 %v2466, %v2466
        %v2483 = vmul.f32 %v2467, %v2467
        %v2484 = vmul.f32 %v2468, %v2468
        %v2485 = vmul.f32 %v2469, %v2469
        %v2486 = vmul.f32 %v2470, %v2470
        %v2487 = vmul.f32 %v2471, %v2471
        %v2488 = vmul.f32 %v2472, %v2472
        %v2489 = vmul.f32 %v2473, %v2473
        %v2490 = vmul.f32 %v2474, %v2474
        %v2491 = vmul.f32 %v2475, %v2475
        %v2492 = vmul.f32 %v2476, %v2476
        %v2493 = vmul.f32 %v2477, %v2477
        %v2494 = vmul.f32 %v2478, %v2478
        %v2495 = vmul.f32 %v2479, -0.055555556
        %v2496 = vmul.f32 %v2480, -0.055555556
        %v2497 = vmul.f32 %v2481, -0.055555556
        %v2498 = vmul.f32 %v2482, -0.055555556
        %v2499 = vmul.f32 %v2483, -0.055555556
        %v2500 = vmul.f32 %v2484, -0.055555556
        %v2501 = vmul.f32 %v2485, -0.055555556
        %v2502 = vmul.f32 %v2486, -0.055555556
        %v2503 = vmul.f32 %v2487, -0.055555556
        %v2504 = vmul.f32 %v2488, -0.055555556
        %v2505 = vmul.f32 %v2489, -0.055555556
        %v2506 = vmul.f32 %v2490, -0.055555556
        %v2507 = vmul.f32 %v2491, -0.055555556
        %v2508 = vmul.f32 %v2492, -0.055555556
        %v2509 = vmul.f32 %v2493, -0.055555556
        %v2510 = vmul.f32 %v2494, -0.055555556
        %v2511 = vmul.f32 %v2495, 1.442695
        %v2512 = vpow.pop %v2511
        %v2513 = vmul.f32 %v2496, 1.442695
        %v2514 = vpow.pop %v2513
        %v2515 = vmul.f32 %v2497, 1.442695
        %v2516 = vpow.pop %v2515
        %v2517 = vmul.f32 %v2498, 1.442695
        %v2518 = vpow.pop %v2517
        %v2519 = vmul.f32 %v2499, 1.442695
        %v2520 = vpow.pop %v2519
        %v2521 = vmul.f32 %v2500, 1.442695
        %v2522 = vpow.pop %v2521
        %v2523 = vmul.f32 %v2501, 1.442695
        %v2524 = vpow.pop %v2523
        %v2525 = vmul.f32 %v2502, 1.442695
        %v2526 = vpow.pop %v2525
        %v2527 = vmul.f32 %v2503, 1.442695
        %v2528 = vpow.pop %v2527
        %v2529 = vmul.f32 %v2504, 1.442695
        %v2530 = vpow.pop %v2529
        %v2531 = vmul.f32 %v2505, 1.442695
        %v2532 = vpow.pop %v2531
        %v2533 = vmul.f32 %v2506, 1.442695
        %v2534 = vpow.pop %v2533
        %v2535 = vmul.f32 %v2507, 1.442695
        %v2536 = vpow.pop %v2535
        %v2537 = vmul.f32 %v2508, 1.442695
        %v2538 = vpow.pop %v2537
        %v2539 = vmul.f32 %v2509, 1.442695
        %v2540 = vpow.pop %v2539
        %v2541 = vmul.f32 %v2510, 1.442695
        %v2542 = vpow.pop %v2541
        %2544 = vset.pattern.permute.xlu0 0
        %2545 = vperm.xlu0 %2544, %v2512
        %v2546 = vpop.permute.xlu0 %2545
        %2549 = vset.pattern.permute.xlu0 0
        %2550 = vperm.xlu0 %2549, %v2514
        %v2551 = vpop.permute.xlu0 %2550
        %2554 = vset.pattern.permute.xlu0 0
        %2555 = vperm.xlu0 %2554, %v2516
        %v2556 = vpop.permute.xlu0 %2555
        %2559 = vset.pattern.permute.xlu0 0
        %2560 = vperm.xlu0 %2559, %v2518
        %v2561 = vpop.permute.xlu0 %2560
        %2564 = vset.pattern.permute.xlu0 0
        %2565 = vperm.xlu0 %2564, %v2520
        %v2566 = vpop.permute.xlu0 %2565
        %2569 = vset.pattern.permute.xlu0 0
        %2570 = vperm.xlu0 %2569, %v2522
        %v2571 = vpop.permute.xlu0 %2570
        %2574 = vset.pattern.permute.xlu0 0
        %2575 = vperm.xlu0 %2574, %v2524
        %v2576 = vpop.permute.xlu0 %2575
        %2579 = vset.pattern.permute.xlu0 0
        %2580 = vperm.xlu0 %2579, %v2526
        %v2581 = vpop.permute.xlu0 %2580
        %2584 = vset.pattern.permute.xlu0 0
        %2585 = vperm.xlu0 %2584, %v2528
        %v2586 = vpop.permute.xlu0 %2585
        %2589 = vset.pattern.permute.xlu0 0
        %2590 = vperm.xlu0 %2589, %v2530
        %v2591 = vpop.permute.xlu0 %2590
        %2594 = vset.pattern.permute.xlu0 0
        %2595 = vperm.xlu0 %2594, %v2532
        %v2596 = vpop.permute.xlu0 %2595
        %2599 = vset.pattern.permute.xlu0 0
        %2600 = vperm.xlu0 %2599, %v2534
        %v2601 = vpop.permute.xlu0 %2600
        %2604 = vset.pattern.permute.xlu0 0
        %2605 = vperm.xlu0 %2604, %v2536
        %v2606 = vpop.permute.xlu0 %2605
        %2609 = vset.pattern.permute.xlu0 0
        %2610 = vperm.xlu0 %2609, %v2538
        %v2611 = vpop.permute.xlu0 %2610
        %2614 = vset.pattern.permute.xlu0 0
        %2615 = vperm.xlu0 %2614, %v2540
        %v2616 = vpop.permute.xlu0 %2615
        %2619 = vset.pattern.permute.xlu0 0
        %2620 = vperm.xlu0 %2619, %v2542
        %v2621 = vpop.permute.xlu0 %2620
        %v2623 = vmul.f32 %v2447, %v2546
        %v2624 = vmul.f32 %v2448, %v2551
        %v2625 = vmul.f32 %v2449, %v2556
        %v2626 = vmul.f32 %v2450, %v2561
        %v2627 = vmul.f32 %v2451, %v2566
        %v2628 = vmul.f32 %v2452, %v2571
        %v2629 = vmul.f32 %v2453, %v2576
        %v2630 = vmul.f32 %v2454, %v2581
        %v2631 = vmul.f32 %v2455, %v2586
        %v2632 = vmul.f32 %v2456, %v2591
        %v2633 = vmul.f32 %v2457, %v2596
        %v2634 = vmul.f32 %v2458, %v2601
        %v2635 = vmul.f32 %v2459, %v2606
        %v2636 = vmul.f32 %v2460, %v2611
        %v2637 = vmul.f32 %v2461, %v2616
        %v2638 = vmul.f32 %v2462, %v2621
        %v2639 = vlaneseq
        %v2640 = vshrl.u32 %v2639, 7
        %v2641 = vadd.s32 %v2640, 8
        %v2642 = vadd.s32 %v2640, 16
        %v2643 = vadd.s32 %v2640, 24
        %v2644 = vld [vmem:[%s415] sm:$0x1]
        %v2645 = vlaneseq
        %v2646 = vshrl.u32 %v2645, 7
        %v2647 = vsub.s32 0, %v2646
        %v2648 = vrot.slane %v2644, %v2647
        %vm2649 = vcmp.eq.s32.totalorder %v2640, %v2648
        %vm2650 = vcmp.eq.s32.totalorder %v2641, %v2648
        %vm2651 = vcmp.eq.s32.totalorder %v2642, %v2648
        %vm2652 = vcmp.eq.s32.totalorder %v2643, %v2648
        %v2653 = vsel %vm2649, 1, 0
        %v2654 = vsel %vm2650, 1, 0
        %v2655 = vsel %vm2651, 1, 0
        %v2656 = vsel %vm2652, 1, 0
        %v2657 = vcvt.s32.f32 %v2653
        %v2658 = vcvt.s32.f32 %v2654
        %v2659 = vcvt.s32.f32 %v2655
        %v2660 = vcvt.s32.f32 %v2656
        %v2661 = vld [vmem:[#allocation2] sm:$0xff]
        %v2662 = vld [vmem:[#allocation2 + $0x8] sm:$0xff]
        %v2663 = vld [vmem:[#allocation2 + $0x10] sm:$0xff]
        %v2664 = vld [vmem:[#allocation2 + $0x18] sm:$0xff]
        %2665 = vmatprep.subr.mxu0 0.0
        %2666 = vmatpush1.msra.mxu0 %v2623
        %2667 = vmatprep.subr.mxu0 0.0
        %2668 = vmatpush1.msra.mxu0 %v2624
        %2669 = vmatprep.subr.mxu0 0.0
        %2670 = vmatpush1.msra.mxu0 %v2625
        %2671 = vmatprep.subr.mxu0 0.0
        %2672 = vmatpush1.msra.mxu0 %v2626
        %2673 = vmatprep.subr.mxu0 0.0
        %2674 = vmatpush1.msra.mxu0 %v2627
        %2675 = vmatprep.subr.mxu0 0.0
        %2676 = vmatpush1.msra.mxu0 %v2628
        %2677 = vmatprep.subr.mxu0 0.0
        %2678 = vmatpush1.msra.mxu0 %v2629
        %2679 = vmatprep.subr.mxu0 0.0
        %2680 = vmatpush1.msra.mxu0 %v2630
        %2681 = vmatprep.subr.mxu0 0.0
        %2682 = vmatpush1.msra.mxu0 %v2631
        %2683 = vmatprep.subr.mxu0 0.0
        %2684 = vmatpush1.msra.mxu0 %v2632
        %2685 = vmatprep.subr.mxu0 0.0
        %2686 = vmatpush1.msra.mxu0 %v2633
        %2687 = vmatprep.subr.mxu0 0.0
        %2688 = vmatpush1.msra.mxu0 %v2634
        %2689 = vmatprep.subr.mxu0 0.0
        %2690 = vmatpush1.msra.mxu0 %v2635
        %2691 = vmatprep.subr.mxu0 0.0
        %2692 = vmatpush1.msra.mxu0 %v2636
        %2693 = vmatprep.subr.mxu0 0.0
        %2694 = vmatpush1.msra.mxu0 %v2637
        %2695 = vmatprep.subr.mxu0 0.0
        %2696 = vmatpush1.msra.mxu0 %v2638
        %2697 = vmatprep.subr.mxu0 0.0
        %2698 = vmatpush1.msra.mxu0 0.0
        %2699 = vmatprep.subr.mxu0 0.0
        %2700 = vmatpush1.msra.mxu0 0.0
        %2701 = vmatprep.subr.mxu0 0.0
        %2702 = vmatpush1.msra.mxu0 0.0
        %2703 = vmatprep.subr.mxu0 0.0
        %2704 = vmatpush1.msra.mxu0 0.0
        %2705 = vmatprep.subr.mxu0 0.0
        %2706 = vmatpush1.msra.mxu0 0.0
        %2707 = vmatprep.subr.mxu0 0.0
        %2708 = vmatpush1.msra.mxu0 0.0
        %2709 = vmatprep.subr.mxu0 0.0
        %2710 = vmatpush1.msra.mxu0 0.0
        %2711 = vmatprep.subr.mxu0 0.0
        %2712 = vmatpush1.msra.mxu0 0.0
        %2713 = vmatprep.subr.mxu0 0.0
        %2714 = vmatpush1.msra.mxu0 0.0
        %2715 = vmatprep.subr.mxu0 0.0
        %2716 = vmatpush1.msra.mxu0 0.0
        %2717 = vmatprep.subr.mxu0 0.0
        %2718 = vmatpush1.msra.mxu0 0.0
        %2719 = vmatprep.subr.mxu0 0.0
        %2720 = vmatpush1.msra.mxu0 0.0
        %2721 = vmatprep.subr.mxu0 0.0
        %2722 = vmatpush1.msra.mxu0 0.0
        %2723 = vmatprep.subr.mxu0 0.0
        %2724 = vmatpush1.msra.mxu0 0.0
        %2725 = vmatprep.subr.mxu0 0.0
        %2726 = vmatpush1.msra.mxu0 0.0
        %2727 = vmatprep.subr.mxu0 0.0
        %2728 = vmatpush1.msra.mxu0 0.0
        %2729 = vmatprep.mubr.f32.mxu0 0.0
        %2730 = vmatmul.mubr.f32.gmra.mrb[0].mxu0 %v2657
        %v2731 = vpop.f32.mrb[0].mxu0
        %v2732 = vadd.f32 0.0, %v2731
        %v2733 = vpop.f32.mrb[0].mxu0
        %2734 = vmatprep.mubr.f32.mxu0 0.0
        %2735 = vmatmul.mubr.f32.gmra.mrb[0].mxu0 %v2658
        %v2736 = vpop.f32.mrb[0].mxu0
        %v2737 = vadd.f32 0.0, %v2736
        %v2738 = vpop.f32.mrb[0].mxu0
        %2739 = vmatprep.mubr.f32.mxu0 0.0
        %2740 = vmatmul.mubr.f32.gmra.mrb[0].mxu0 %v2659
        %v2741 = vpop.f32.mrb[0].mxu0
        %v2742 = vadd.f32 0.0, %v2741
        %v2743 = vpop.f32.mrb[0].mxu0
        %2744 = vmatprep.mubr.f32.mxu0 0.0
        %2745 = vmatmul.mubr.f32.gmra.mrb[0].mxu0 %v2660
        %v2746 = vpop.f32.mrb[0].mxu0
        %v2747 = vadd.f32 0.0, %v2746
        %v2748 = vpop.f32.mrb[0].mxu0
        %2749 = vdwg.mxu0
        %v2750 = vadd.f32 %v2661, %v2732
        %v2751 = vadd.f32 %v2662, %v2737
        %v2752 = vadd.f32 %v2663, %v2742
        %v2753 = vadd.f32 %v2664, %v2747
        %2754 = vst.msk [vmem:[#allocation2] sm:$0xff] %vm1090, %v2750
        %2755 = vst.msk [vmem:[#allocation2 + $0x8] sm:$0xff] %vm1090, %v2751
        %2756 = vst.msk [vmem:[#allocation2 + $0x10] sm:$0xff] %vm1090, %v2752
        %2757 = vst.msk [vmem:[#allocation2 + $0x18] sm:$0xff] %vm1090, %v2753
        // Predicated region
        $region65: #{tpu_custom_call.1} parent=59 // pred_check
          %p2758 = pneg %p270
        $region66: #{tpu_custom_call.1} parent=59 // pred_check_branch
          %2760 = sbr.rel (%p2758) target = $region68
        $region67: #{tpu_custom_call.1} parent=59 // pred_region
          %s2762 = ssub.s32 512, 512
          %2763 = vsyncadd [#allocation3], %s2762
          %s2764 = sshll.u32 [#allocation2], 4
          %s2765 = int_to_ptr.vmem [resolvable:$true] %s2764
          %2770 = dma.vmem_to_hbm [thread:$0]  %s2765, 512, %s10, [#allocation3], 128, 128, 8
        $region68: #{tpu_custom_call.1} parent=59 // pred_fallthru
          _
        // Predicated region
        $region69: #{tpu_custom_call.1} parent=59 // pred_check
          %p2771 = pneg %p270
        $region70: #{tpu_custom_call.1} parent=59 // pred_check_branch
          %2773 = sbr.rel (%p2771) target = $region72
        $region71: #{tpu_custom_call.1} parent=59 // pred_region
          %2774 = dma.done [#allocation3], 512
        $region72: #{tpu_custom_call.1} parent=59 // pred_fallthru
          _
      $region60: #{tpu_custom_call.1} parent=5 // pred_fallthru
        _
      %p2775 = scmp.le.s32.totalorder 2, %s17
      // Predicated region
      $region73: #{tpu_custom_call.1} parent=5 // pred_check
        %p2776 = pneg %p2775
      $region74: #{tpu_custom_call.1} parent=5 // pred_check_branch
        %2778 = sbr.rel (%p2776) target = $region76
      $region75: #{tpu_custom_call.1} parent=5 // pred_region
        %s2779 = ssub.s32 %s17, 2
      $region76: #{tpu_custom_call.1} parent=5 // pred_fallthru
        _
    $region6: #{tpu_custom_call.1} parent=1 // loop_footer
      %s21 = sadd.s32 1, %s17
    $region7: #{tpu_custom_call.1} parent=1 // loop_footer_branch
      %16 = sbr.rel target = $region3
    $region8: #{tpu_custom_call.1} parent=1 // loop_exit
      _
    %2780 = vsyncpa [#allocation3], 1
    %s2781 = scalar_lea.sflag [#allocation3], 1
    %2782 = vsyncpa %s2781, 1

</llo_original>
